<compile_context>
chip_gen: v6e
topology: v6e:2x2x1
jax: 0.10.0
libtpu: 0.0.40
codegen_flags: <defaults>
</compile_context>

<pallas_src>
import functools

import jax
import jax.numpy as jnp
from jax.experimental import pallas as pl
from jax.experimental.pallas import tpu as pltpu


# ----------------------------- Pallas kernel ------------------------------ #
def _ig_kernel(steps, roi_ref, img_ref, i0_ref, w1_ref, w1t_ref, b1_ref,
               w2_ref, out_ref):
    """Single invocation; the alpha loop is unrolled in-kernel.

    roi_ref : SMEM scalar-prefetch, shape (1,) int32
    img_ref : (B, D)    flattened input image
    i0_ref  : (B, D)    flattened baseline I_0
    w1_ref  : (D, HID)  first-layer weight
    w1t_ref : (HID, D)  first-layer weight, pre-transposed (for the backward)
    b1_ref  : (1, HID)  first-layer bias
    w2_ref  : (F, HID)  second-layer weight (torch Linear(HID, F).weight layout)
    out_ref : (1, D)    |accumulated grad| averaged over batch
    """
    img = img_ref[...]
    i0 = i0_ref[...]
    w1 = w1_ref[...]
    b1 = b1_ref[...]

    # Hidden pre-activations at the path endpoints; xp is affine in alpha, so
    # h(alpha) = (1 - alpha) * h0 + alpha * h1 = h0 + alpha * (h1 - h0).
    h0 = jnp.dot(i0, w1, preferred_element_type=jnp.float32) + b1    # (B, HID)
    h1 = jnp.dot(img, w1, preferred_element_type=jnp.float32) + b1   # (B, HID)
    hd = h1 - h0                                                     # (B, HID)

    # Gather row `roi` of W2 once via one-hot masked reduce (tiny: F x HID),
    # folding the 1/batch factor of features[:, roi].mean() into it.
    roi = roi_ref[0]
    f_dim, h_dim = w2_ref.shape
    row_ids = jax.lax.broadcasted_iota(jnp.int32, (f_dim, h_dim), 0)
    w2_row = jnp.sum(jnp.where(row_ids == roi, w2_ref[...], 0.0),
                     axis=0, keepdims=True)                          # (1, HID)
    batch = img_ref.shape[0]
    w2_scaled = w2_row * jnp.float32(1.0 / batch)                    # (1, HID)

    # torch.linspace(0, 1, steps): step size 1/(steps-1); a single step is 0.0.
    denom = (1.0 / (steps - 1)) if steps > 1 else 0.0

    # PyTorch accumulates img.grad across the alpha loop:
    #   grad = sum_s alpha_s * ((1/B) * W2[roi] * relu_mask_s) @ W1.T
    #        = ((sum_s alpha_s * relu_mask_s) * w2_scaled) @ W1.T
    # so we only need the alpha-weighted mask sum per (b, hidden) element.
    m_sum = jnp.zeros(h0.shape, jnp.float32)
    for s in range(1, steps):          # s = 0 has alpha = 0 -> zero gradient
        alpha = jnp.float32(s * denom)
        h = h0 + alpha * hd
        m_sum = m_sum + jnp.where(h > 0.0, alpha, 0.0)

    g_sum = m_sum * w2_scaled                                        # (B, HID)

    # Single backward matmul: accumulated grad w.r.t. img for all alphas.
    acc = jnp.dot(g_sum, w1t_ref[...],
                  preferred_element_type=jnp.float32)                # (B, D)

    # stack(ig) holds `steps` references to the same final grad tensor, so
    # abs().mean([0,1]) == batch-mean of |final accumulated grad|.
    out_ref[...] = jnp.mean(jnp.abs(acc), axis=0, keepdims=True)


# ------------------------------ JAX wrapper -------------------------------- #
def integrated_gradient_pallas(img, roi, W1, b1, W2, I0=None, steps=10):
    """img: (B, C, H, W) float32, roi: int, returns (C, H, W) float32."""
    B, C, H, W = img.shape
    D = C * H * W
    HID = W1.shape[1]
    F = W2.shape[0]

    if I0 is None:
        I0 = jnp.zeros_like(img)

    x = img.reshape(B, D).astype(jnp.float32)
    x0 = I0.reshape(B, D).astype(jnp.float32)
    W1f = W1.astype(jnp.float32)
    W1T = W1f.T                              # transposed once, outside kernel
    b1_2d = b1.reshape(1, HID).astype(jnp.float32)
    W2f = W2.astype(jnp.float32)
    roi_arr = jnp.array([roi], dtype=jnp.int32)

    # Everything fits VMEM comfortably (few hundred KiB at these sizes) and is
    # fetched exactly once since the grid has a single step.
    # TODO(synk): at production image sizes, tile D with a "parallel" grid axis
    # (and bf16 weights) to use both v7x TensorCores and its smaller VMEM.
    grid_spec = pltpu.PrefetchScalarGridSpec(
        num_scalar_prefetch=1,
        grid=(1,),
        in_specs=[
            pl.BlockSpec((B, D), lambda i, roi: (0, 0)),       # img
            pl.BlockSpec((B, D), lambda i, roi: (0, 0)),       # I_0
            pl.BlockSpec((D, HID), lambda i, roi: (0, 0)),     # W1
            pl.BlockSpec((HID, D), lambda i, roi: (0, 0)),     # W1^T
            pl.BlockSpec((1, HID), lambda i, roi: (0, 0)),     # b1
            pl.BlockSpec((F, HID), lambda i, roi: (0, 0)),     # W2
        ],
        out_specs=pl.BlockSpec((1, D), lambda i, roi: (0, 0)),
    )

    out = pl.pallas_call(
        functools.partial(_ig_kernel, steps),
        out_shape=jax.ShapeDtypeStruct((1, D), jnp.float32),
        grid_spec=grid_spec,
        compiler_params=pltpu.CompilerParams(
            dimension_semantics=("arbitrary",)),
    )(roi_arr, x, x0, W1f, W1T, b1_2d, W2f)

    return out.reshape(C, H, W)


# --------------------------- pure-JAX reference ---------------------------- #
def _feature_ext(x_flat, W1, b1, W2, b2):
    h = jnp.maximum(x_flat @ W1 + b1, 0.0)
    return h @ W2.T + b2


def reference_ig(img, roi, W1, b1, W2, b2, I0=None, steps=10):
    B, C, H, W = img.shape
    x = img.reshape(B, -1).astype(jnp.float32)
    x0 = jnp.zeros_like(x) if I0 is None else I0.reshape(B, -1)

    def loss(xi, alpha):
        xp = x0 + alpha * (xi - x0)
        f = _feature_ext(xp, W1, b1, W2, b2)
        return f[:, roi].mean()

    acc = jnp.zeros_like(x)
    for i in range(steps):
        alpha = i / (steps - 1) if steps > 1 else 0.0
        acc = acc + jax.grad(loss)(x, alpha)   # accumulated, like img.grad
    return jnp.abs(acc).mean(axis=0).reshape(C, H, W)


# ---------------------------------- main ----------------------------------- #
if __name__ == "__main__":
    key = jax.random.PRNGKey(0)
    k_img, k_w1, k_b1, k_w2, k_b2 = jax.random.split(key, 5)

    B, C, H, W = 2, 4, 16, 16
    D = C * H * W          # 1024
    HID, F = 32, 8
    roi = 3
    steps = 10

    img = jax.random.normal(k_img, (B, C, H, W), jnp.float32)
    # Deterministic synthetic feature-extractor parameters (no checkpoint).
    W1 = jax.random.normal(k_w1, (D, HID), jnp.float32) / jnp.sqrt(D)
    b1 = jax.random.normal(k_b1, (HID,), jnp.float32) * 0.1
    W2 = jax.random.normal(k_w2, (F, HID), jnp.float32) / jnp.sqrt(HID)
    b2 = jax.random.normal(k_b2, (F,), jnp.float32) * 0.1  # unused by grads

    out = integrated_gradient_pallas(img, roi, W1, b1, W2, steps=steps)
    out = jax.block_until_ready(out)

    ref = reference_ig(img, roi, W1, b1, W2, b2, steps=steps)
    assert out.shape == (C, H, W), out.shape
    assert bool(jnp.all(jnp.isfinite(out)))
    assert bool(jnp.allclose(out, ref, rtol=2e-2, atol=1e-4)), (
        float(jnp.max(jnp.abs(out - ref))))

    print("KERNEL_OK")
</pallas_src>

<mosaic_0001>
module attributes {stable_mosaic.version = 11 : i64} {
  func.func @_ig_kernel(%arg0: i32, %arg1: memref<1xi32, #tpu.memory_space<smem>>, %arg2: memref<2x1024xf32, #tpu.memory_space<vmem>>, %arg3: memref<2x1024xf32, #tpu.memory_space<vmem>>, %arg4: memref<1024x32xf32, #tpu.memory_space<vmem>>, %arg5: memref<32x1024xf32, #tpu.memory_space<vmem>>, %arg6: memref<1x32xf32, #tpu.memory_space<vmem>>, %arg7: memref<8x32xf32, #tpu.memory_space<vmem>>, %arg8: memref<1x1024xf32, #tpu.memory_space<vmem>>) attributes {dimension_semantics = [#tpu.dimension_semantics<arbitrary>], iteration_bounds = array<i64: 1>, scalar_prefetch = 1 : i64, scratch_operands = 0 : i64, tpu.core_type = #tpu.core_type<tc>, window_params = [{pipeline_mode = #tpu.pipeline_mode<synchronous>, transform_indices = @transform_0, window_bounds = array<i64: 2, 1024>}, {pipeline_mode = #tpu.pipeline_mode<synchronous>, transform_indices = @transform_1, window_bounds = array<i64: 2, 1024>}, {pipeline_mode = #tpu.pipeline_mode<synchronous>, transform_indices = @transform_2, window_bounds = array<i64: 1024, 32>}, {pipeline_mode = #tpu.pipeline_mode<synchronous>, transform_indices = @transform_3, window_bounds = array<i64: 32, 1024>}, {pipeline_mode = #tpu.pipeline_mode<synchronous>, transform_indices = @transform_4, window_bounds = array<i64: 1, 32>}, {pipeline_mode = #tpu.pipeline_mode<synchronous>, transform_indices = @transform_5, window_bounds = array<i64: 8, 32>}, {pipeline_mode = #tpu.pipeline_mode<synchronous>, transform_indices = @transform_6, window_bounds = array<i64: 1, 1024>}]} {
    %c0 = arith.constant 0 : index
    %c0_0 = arith.constant 0 : index
    %0 = vector.load %arg2[%c0, %c0_0] : memref<2x1024xf32, #tpu.memory_space<vmem>>, vector<2x1024xf32>
    %c0_1 = arith.constant 0 : index
    %c0_2 = arith.constant 0 : index
    %1 = vector.load %arg3[%c0_1, %c0_2] : memref<2x1024xf32, #tpu.memory_space<vmem>>, vector<2x1024xf32>
    %c0_3 = arith.constant 0 : index
    %c0_4 = arith.constant 0 : index
    %2 = vector.load %arg4[%c0_3, %c0_4] : memref<1024x32xf32, #tpu.memory_space<vmem>>, vector<1024x32xf32>
    %c0_5 = arith.constant 0 : index
    %c0_6 = arith.constant 0 : index
    %3 = vector.load %arg6[%c0_5, %c0_6] : memref<1x32xf32, #tpu.memory_space<vmem>>, vector<1x32xf32>
    %cst = arith.constant dense<0.000000e+00> : vector<2x32xf32>
    %4 = tpu.matmul %1, %2, %cst {dimension_numbers = #tpu.dot_dimension_numbers<[1], [0], [0], [1], [0, 0, 1, 1], [], []>} : vector<2x1024xf32>, vector<1024x32xf32>, vector<2x32xf32> -> vector<2x32xf32>
    %5 = vector.broadcast %3 : vector<1x32xf32> to vector<2x32xf32>
    %6 = arith.addf %4, %5 : vector<2x32xf32>
    %cst_7 = arith.constant dense<0.000000e+00> : vector<2x32xf32>
    %7 = tpu.matmul %0, %2, %cst_7 {dimension_numbers = #tpu.dot_dimension_numbers<[1], [0], [0], [1], [0, 0, 1, 1], [], []>} : vector<2x1024xf32>, vector<1024x32xf32>, vector<2x32xf32> -> vector<2x32xf32>
    %8 = vector.broadcast %3 : vector<1x32xf32> to vector<2x32xf32>
    %9 = arith.addf %7, %8 : vector<2x32xf32>
    %10 = arith.subf %9, %6 : vector<2x32xf32>
    %c0_8 = arith.constant 0 : index
    %11 = memref.load %arg1[%c0_8] : memref<1xi32, #tpu.memory_space<smem>>
    %12 = tpu.iota {dimensions = array<i32: 0>} : vector<8x32xi32>
    %13 = vector.broadcast %11 : i32 to vector<8x32xi32>
    %14 = arith.cmpi eq, %12, %13 : vector<8x32xi32>
    %c0_9 = arith.constant 0 : index
    %c0_10 = arith.constant 0 : index
    %15 = vector.load %arg7[%c0_9, %c0_10] : memref<8x32xf32, #tpu.memory_space<vmem>>, vector<8x32xf32>
    %cst_11 = arith.constant 0.000000e+00 : f32
    %16 = vector.broadcast %cst_11 : f32 to vector<8x32xf32>
    %17 = arith.select %14, %15, %16 : vector<8x32xi1>, vector<8x32xf32>
    %cst_12 = arith.constant dense<0.000000e+00> : vector<32xf32>
    %18 = vector.multi_reduction <add>, %17, %cst_12 [0] : vector<8x32xf32> to vector<32xf32>
    %19 = vector.shape_cast %18 : vector<32xf32> to vector<1x32xf32>
    %cst_13 = arith.constant 5.000000e-01 : f32
    %20 = vector.broadcast %cst_13 : f32 to vector<1x32xf32>
    %21 = arith.mulf %19, %20 : vector<1x32xf32>
    %cst_14 = arith.constant 0.000000e+00 : f32
    %22 = vector.broadcast %cst_14 : f32 to vector<2x32xf32>
    %cst_15 = arith.constant 0.111111112 : f32
    %23 = vector.broadcast %cst_15 : f32 to vector<2x32xf32>
    %24 = arith.mulf %23, %10 : vector<2x32xf32>
    %25 = arith.addf %6, %24 : vector<2x32xf32>
    %cst_16 = arith.constant 0.000000e+00 : f32
    %26 = vector.broadcast %cst_16 : f32 to vector<2x32xf32>
    %27 = arith.cmpf ogt, %25, %26 : vector<2x32xf32>
    %cst_17 = arith.constant 0.111111112 : f32
    %cst_18 = arith.constant 0.000000e+00 : f32
    %28 = vector.broadcast %cst_17 : f32 to vector<2x32xf32>
    %29 = vector.broadcast %cst_18 : f32 to vector<2x32xf32>
    %30 = arith.select %27, %28, %29 : vector<2x32xi1>, vector<2x32xf32>
    %31 = arith.addf %22, %30 : vector<2x32xf32>
    %cst_19 = arith.constant 0.222222224 : f32
    %32 = vector.broadcast %cst_19 : f32 to vector<2x32xf32>
    %33 = arith.mulf %32, %10 : vector<2x32xf32>
    %34 = arith.addf %6, %33 : vector<2x32xf32>
    %cst_20 = arith.constant 0.000000e+00 : f32
    %35 = vector.broadcast %cst_20 : f32 to vector<2x32xf32>
    %36 = arith.cmpf ogt, %34, %35 : vector<2x32xf32>
    %cst_21 = arith.constant 0.222222224 : f32
    %cst_22 = arith.constant 0.000000e+00 : f32
    %37 = vector.broadcast %cst_21 : f32 to vector<2x32xf32>
    %38 = vector.broadcast %cst_22 : f32 to vector<2x32xf32>
    %39 = arith.select %36, %37, %38 : vector<2x32xi1>, vector<2x32xf32>
    %40 = arith.addf %31, %39 : vector<2x32xf32>
    %cst_23 = arith.constant 0.333333343 : f32
    %41 = vector.broadcast %cst_23 : f32 to vector<2x32xf32>
    %42 = arith.mulf %41, %10 : vector<2x32xf32>
    %43 = arith.addf %6, %42 : vector<2x32xf32>
    %cst_24 = arith.constant 0.000000e+00 : f32
    %44 = vector.broadcast %cst_24 : f32 to vector<2x32xf32>
    %45 = arith.cmpf ogt, %43, %44 : vector<2x32xf32>
    %cst_25 = arith.constant 0.333333343 : f32
    %cst_26 = arith.constant 0.000000e+00 : f32
    %46 = vector.broadcast %cst_25 : f32 to vector<2x32xf32>
    %47 = vector.broadcast %cst_26 : f32 to vector<2x32xf32>
    %48 = arith.select %45, %46, %47 : vector<2x32xi1>, vector<2x32xf32>
    %49 = arith.addf %40, %48 : vector<2x32xf32>
    %cst_27 = arith.constant 0.444444448 : f32
    %50 = vector.broadcast %cst_27 : f32 to vector<2x32xf32>
    %51 = arith.mulf %50, %10 : vector<2x32xf32>
    %52 = arith.addf %6, %51 : vector<2x32xf32>
    %cst_28 = arith.constant 0.000000e+00 : f32
    %53 = vector.broadcast %cst_28 : f32 to vector<2x32xf32>
    %54 = arith.cmpf ogt, %52, %53 : vector<2x32xf32>
    %cst_29 = arith.constant 0.444444448 : f32
    %cst_30 = arith.constant 0.000000e+00 : f32
    %55 = vector.broadcast %cst_29 : f32 to vector<2x32xf32>
    %56 = vector.broadcast %cst_30 : f32 to vector<2x32xf32>
    %57 = arith.select %54, %55, %56 : vector<2x32xi1>, vector<2x32xf32>
    %58 = arith.addf %49, %57 : vector<2x32xf32>
    %cst_31 = arith.constant 0.555555582 : f32
    %59 = vector.broadcast %cst_31 : f32 to vector<2x32xf32>
    %60 = arith.mulf %59, %10 : vector<2x32xf32>
    %61 = arith.addf %6, %60 : vector<2x32xf32>
    %cst_32 = arith.constant 0.000000e+00 : f32
    %62 = vector.broadcast %cst_32 : f32 to vector<2x32xf32>
    %63 = arith.cmpf ogt, %61, %62 : vector<2x32xf32>
    %cst_33 = arith.constant 0.555555582 : f32
    %cst_34 = arith.constant 0.000000e+00 : f32
    %64 = vector.broadcast %cst_33 : f32 to vector<2x32xf32>
    %65 = vector.broadcast %cst_34 : f32 to vector<2x32xf32>
    %66 = arith.select %63, %64, %65 : vector<2x32xi1>, vector<2x32xf32>
    %67 = arith.addf %58, %66 : vector<2x32xf32>
    %cst_35 = arith.constant 0.666666686 : f32
    %68 = vector.broadcast %cst_35 : f32 to vector<2x32xf32>
    %69 = arith.mulf %68, %10 : vector<2x32xf32>
    %70 = arith.addf %6, %69 : vector<2x32xf32>
    %cst_36 = arith.constant 0.000000e+00 : f32
    %71 = vector.broadcast %cst_36 : f32 to vector<2x32xf32>
    %72 = arith.cmpf ogt, %70, %71 : vector<2x32xf32>
    %cst_37 = arith.constant 0.666666686 : f32
    %cst_38 = arith.constant 0.000000e+00 : f32
    %73 = vector.broadcast %cst_37 : f32 to vector<2x32xf32>
    %74 = vector.broadcast %cst_38 : f32 to vector<2x32xf32>
    %75 = arith.select %72, %73, %74 : vector<2x32xi1>, vector<2x32xf32>
    %76 = arith.addf %67, %75 : vector<2x32xf32>
    %cst_39 = arith.constant 0.777777791 : f32
    %77 = vector.broadcast %cst_39 : f32 to vector<2x32xf32>
    %78 = arith.mulf %77, %10 : vector<2x32xf32>
    %79 = arith.addf %6, %78 : vector<2x32xf32>
    %cst_40 = arith.constant 0.000000e+00 : f32
    %80 = vector.broadcast %cst_40 : f32 to vector<2x32xf32>
    %81 = arith.cmpf ogt, %79, %80 : vector<2x32xf32>
    %cst_41 = arith.constant 0.777777791 : f32
    %cst_42 = arith.constant 0.000000e+00 : f32
    %82 = vector.broadcast %cst_41 : f32 to vector<2x32xf32>
    %83 = vector.broadcast %cst_42 : f32 to vector<2x32xf32>
    %84 = arith.select %81, %82, %83 : vector<2x32xi1>, vector<2x32xf32>
    %85 = arith.addf %76, %84 : vector<2x32xf32>
    %cst_43 = arith.constant 0.888888895 : f32
    %86 = vector.broadcast %cst_43 : f32 to vector<2x32xf32>
    %87 = arith.mulf %86, %10 : vector<2x32xf32>
    %88 = arith.addf %6, %87 : vector<2x32xf32>
    %cst_44 = arith.constant 0.000000e+00 : f32
    %89 = vector.broadcast %cst_44 : f32 to vector<2x32xf32>
    %90 = arith.cmpf ogt, %88, %89 : vector<2x32xf32>
    %cst_45 = arith.constant 0.888888895 : f32
    %cst_46 = arith.constant 0.000000e+00 : f32
    %91 = vector.broadcast %cst_45 : f32 to vector<2x32xf32>
    %92 = vector.broadcast %cst_46 : f32 to vector<2x32xf32>
    %93 = arith.select %90, %91, %92 : vector<2x32xi1>, vector<2x32xf32>
    %94 = arith.addf %85, %93 : vector<2x32xf32>
    %cst_47 = arith.constant 1.000000e+00 : f32
    %95 = vector.broadcast %cst_47 : f32 to vector<2x32xf32>
    %96 = arith.mulf %95, %10 : vector<2x32xf32>
    %97 = arith.addf %6, %96 : vector<2x32xf32>
    %cst_48 = arith.constant 0.000000e+00 : f32
    %98 = vector.broadcast %cst_48 : f32 to vector<2x32xf32>
    %99 = arith.cmpf ogt, %97, %98 : vector<2x32xf32>
    %cst_49 = arith.constant 1.000000e+00 : f32
    %cst_50 = arith.constant 0.000000e+00 : f32
    %100 = vector.broadcast %cst_49 : f32 to vector<2x32xf32>
    %101 = vector.broadcast %cst_50 : f32 to vector<2x32xf32>
    %102 = arith.select %99, %100, %101 : vector<2x32xi1>, vector<2x32xf32>
    %103 = arith.addf %94, %102 : vector<2x32xf32>
    %104 = vector.broadcast %21 : vector<1x32xf32> to vector<2x32xf32>
    %105 = arith.mulf %103, %104 : vector<2x32xf32>
    %c0_51 = arith.constant 0 : index
    %c0_52 = arith.constant 0 : index
    %106 = vector.load %arg5[%c0_51, %c0_52] : memref<32x1024xf32, #tpu.memory_space<vmem>>, vector<32x1024xf32>
    %cst_53 = arith.constant dense<0.000000e+00> : vector<2x1024xf32>
    %107 = tpu.matmul %105, %106, %cst_53 {dimension_numbers = #tpu.dot_dimension_numbers<[1], [0], [0], [1], [0, 0, 1, 1], [], []>} : vector<2x32xf32>, vector<32x1024xf32>, vector<2x1024xf32> -> vector<2x1024xf32>
    %108 = math.absf %107 : vector<2x1024xf32>
    %cst_54 = arith.constant dense<0.000000e+00> : vector<1024xf32>
    %109 = vector.multi_reduction <add>, %108, %cst_54 [0] : vector<2x1024xf32> to vector<1024xf32>
    %110 = vector.shape_cast %109 : vector<1024xf32> to vector<1x1024xf32>
    %cst_55 = arith.constant 2.000000e+00 : f32
    %111 = vector.broadcast %cst_55 : f32 to vector<1x1024xf32>
    %112 = arith.divf %110, %111 : vector<1x1024xf32>
    %c0_56 = arith.constant 0 : index
    %c0_57 = arith.constant 0 : index
    %113 = vector.load %arg8[%c0_56, %c0_57] : memref<1x1024xf32, #tpu.memory_space<vmem>>, vector<1x1024xf32>
    tpu.vector_store %arg8[%c0_56, %c0_57], %112 {strides = array<i32>} : memref<1x1024xf32, #tpu.memory_space<vmem>>, vector<1x1024xf32>,
    return
  }
  func.func @transform_0(%arg0: i32, %arg1: memref<1xi32, #tpu.memory_space<smem>>) -> (i32, i32) {
    %c0_i32 = arith.constant 0 : i32
    %c0_i32_0 = arith.constant 0 : i32
    %c0_i32_1 = arith.constant 0 : i32
    return %c0_i32, %c0_i32_0 : i32, i32
  }
  func.func @transform_1(%arg0: i32, %arg1: memref<1xi32, #tpu.memory_space<smem>>) -> (i32, i32) {
    %c0_i32 = arith.constant 0 : i32
    %c0_i32_0 = arith.constant 0 : i32
    %c0_i32_1 = arith.constant 0 : i32
    return %c0_i32, %c0_i32_0 : i32, i32
  }
  func.func @transform_2(%arg0: i32, %arg1: memref<1xi32, #tpu.memory_space<smem>>) -> (i32, i32) {
    %c0_i32 = arith.constant 0 : i32
    %c0_i32_0 = arith.constant 0 : i32
    %c0_i32_1 = arith.constant 0 : i32
    return %c0_i32, %c0_i32_0 : i32, i32
  }
  func.func @transform_3(%arg0: i32, %arg1: memref<1xi32, #tpu.memory_space<smem>>) -> (i32, i32) {
    %c0_i32 = arith.constant 0 : i32
    %c0_i32_0 = arith.constant 0 : i32
    %c0_i32_1 = arith.constant 0 : i32
    return %c0_i32, %c0_i32_0 : i32, i32
  }
  func.func @transform_4(%arg0: i32, %arg1: memref<1xi32, #tpu.memory_space<smem>>) -> (i32, i32) {
    %c0_i32 = arith.constant 0 : i32
    %c0_i32_0 = arith.constant 0 : i32
    %c0_i32_1 = arith.constant 0 : i32
    return %c0_i32, %c0_i32_0 : i32, i32
  }
  func.func @transform_5(%arg0: i32, %arg1: memref<1xi32, #tpu.memory_space<smem>>) -> (i32, i32) {
    %c0_i32 = arith.constant 0 : i32
    %c0_i32_0 = arith.constant 0 : i32
    %c0_i32_1 = arith.constant 0 : i32
    return %c0_i32, %c0_i32_0 : i32, i32
  }
  func.func @transform_6(%arg0: i32, %arg1: memref<1xi32, #tpu.memory_space<smem>>) -> (i32, i32) {
    %c0_i32 = arith.constant 0 : i32
    %c0_i32_0 = arith.constant 0 : i32
    %c0_i32_1 = arith.constant 0 : i32
    return %c0_i32, %c0_i32_0 : i32, i32
  }
}

</mosaic_0001>

<llo_original>
// kernel: tpu_custom_call.1
$region0: #{tpu_custom_call.1}
  #allocation0 [shape = 'u32[]', space=smem, size = 0x4, offset = 0x4, fixed_abs, tag = 'smem constant byte address 0x4 - core index']
  #allocation1 [shape = 'u32[144,128]{1,0:T(1,128)}', space=vmem, size = 0x12000, scoped, tag = 'internal scratch']
  #allocation2 [shape = 's32[1]{0}', space=sflag, size = 0x4, scoped, tag = 'scoped memory for tpu_custom_call.1']
  #allocation3 [shape = 's32[1]{0:T(128)S(6)}', space=smem, size = 0x200, scoped, tag = 'prefetched SMEM operand 0']
  %s0 = inlined_call_operand.<no memory space> [shape: s32[1], index: 0, kind: input, shape index: {}]
  %s1 = inlined_call_operand.vmem [shape: f32[2,1024], index: 1, kind: input, shape index: {}]
  %s2 = inlined_call_operand.vmem [shape: f32[2,1024], index: 2, kind: input, shape index: {}]
  %s3 = inlined_call_operand.vmem [shape: f32[1024,32], index: 3, kind: input, shape index: {}]
  %s4 = inlined_call_operand.vmem [shape: f32[32,1024], index: 4, kind: input, shape index: {}]
  %s5 = inlined_call_operand.vmem [shape: f32[1,32], index: 5, kind: input, shape index: {}]
  %s6 = inlined_call_operand.vmem [shape: f32[8,32], index: 6, kind: input, shape index: {}]
  %s7 = inlined_call_operand.hbm [shape: f32[1,1024], index: 7, kind: output, shape index: {}]
  %s8 = sld [smem:[#allocation0]]
  $region34: #{tpu_custom_call.1} parent=0
    _
  %s10 = ssub.s32 1, %s8
  %s11 = scalar_select 0, %s10, %s8
  %12 = sst [smem:[#allocation3]] %s0
  $region1: #{tpu_custom_call.1} parent=0
    #allocation4 [shape = 'u8[4096]{0}', space=vmem, size = 0x1000, scoped, tag = 'output window, operand 0, single buffered']
    #allocation5 [shape = 's32[1]{0}', space=sflag, size = 0x4, scoped, tag = 'scoped memory for tpu_custom_call.1']
    %13 = vsyncpa [#allocation5], 0
    // Predicated region
    $region2: #{tpu_custom_call.1} parent=1 // pred_check
      _
    $region3: #{tpu_custom_call.1} parent=1 // pred_check_branch
      %15 = sbr.rel (0) target = $region5
    $region4: #{tpu_custom_call.1} parent=1 // pred_region
      _
    $region5: #{tpu_custom_call.1} parent=1 // pred_fallthru
      _
    // Predicated region
    $region6: #{tpu_custom_call.1} parent=1 // pred_check
      _
    $region7: #{tpu_custom_call.1} parent=1 // pred_check_branch
      %17 = sbr.rel (0) target = $region9
    $region8: #{tpu_custom_call.1} parent=1 // pred_region
      _
    $region9: #{tpu_custom_call.1} parent=1 // pred_fallthru
      _
    // Predicated region
    $region10: #{tpu_custom_call.1} parent=1 // pred_check
      _
    $region11: #{tpu_custom_call.1} parent=1 // pred_check_branch
      %19 = sbr.rel (0) target = $region13
    $region12: #{tpu_custom_call.1} parent=1 // pred_region
      _
    $region13: #{tpu_custom_call.1} parent=1 // pred_fallthru
      _
    // Predicated region
    $region14: #{tpu_custom_call.1} parent=1 // pred_check
      _
    $region15: #{tpu_custom_call.1} parent=1 // pred_check_branch
      %21 = sbr.rel (0) target = $region17
    $region16: #{tpu_custom_call.1} parent=1 // pred_region
      _
    $region17: #{tpu_custom_call.1} parent=1 // pred_fallthru
      _
    // Predicated region
    $region18: #{tpu_custom_call.1} parent=1 // pred_check
      _
    $region19: #{tpu_custom_call.1} parent=1 // pred_check_branch
      %23 = sbr.rel (0) target = $region21
    $region20: #{tpu_custom_call.1} parent=1 // pred_region
      _
    $region21: #{tpu_custom_call.1} parent=1 // pred_fallthru
      _
    // Predicated region
    $region22: #{tpu_custom_call.1} parent=1 // pred_check
      _
    $region23: #{tpu_custom_call.1} parent=1 // pred_check_branch
      %25 = sbr.rel (0) target = $region25
    $region24: #{tpu_custom_call.1} parent=1 // pred_region
      _
    $region25: #{tpu_custom_call.1} parent=1 // pred_fallthru
      _
    %v26 = vld [vmem:[%s1] sm:$0xff]
    %v27 = vld [vmem:[%s1 + $0x8] sm:$0xff]
    %v28 = vld [vmem:[%s2] sm:$0xff]
    %v29 = vld [vmem:[%s2 + $0x8] sm:$0xff]
    %v30 = vld [vmem:[%s3] sm:$0xff]
    %v31 = vld [vmem:[%s3 + $0x8] sm:$0xff]
    %v32 = vld [vmem:[%s3 + $0x10] sm:$0xff]
    %v33 = vld [vmem:[%s3 + $0x18] sm:$0xff]
    %v34 = vld [vmem:[%s3 + $0x20] sm:$0xff]
    %v35 = vld [vmem:[%s3 + $0x28] sm:$0xff]
    %v36 = vld [vmem:[%s3 + $0x30] sm:$0xff]
    %v37 = vld [vmem:[%s3 + $0x38] sm:$0xff]
    %v38 = vld [vmem:[%s3 + $0x40] sm:$0xff]
    %v39 = vld [vmem:[%s3 + $0x48] sm:$0xff]
    %v40 = vld [vmem:[%s3 + $0x50] sm:$0xff]
    %v41 = vld [vmem:[%s3 + $0x58] sm:$0xff]
    %v42 = vld [vmem:[%s3 + $0x60] sm:$0xff]
    %v43 = vld [vmem:[%s3 + $0x68] sm:$0xff]
    %v44 = vld [vmem:[%s3 + $0x70] sm:$0xff]
    %v45 = vld [vmem:[%s3 + $0x78] sm:$0xff]
    %v46 = vld [vmem:[%s3 + $0x80] sm:$0xff]
    %v47 = vld [vmem:[%s3 + $0x88] sm:$0xff]
    %v48 = vld [vmem:[%s3 + $0x90] sm:$0xff]
    %v49 = vld [vmem:[%s3 + $0x98] sm:$0xff]
    %v50 = vld [vmem:[%s3 + $0xa0] sm:$0xff]
    %v51 = vld [vmem:[%s3 + $0xa8] sm:$0xff]
    %v52 = vld [vmem:[%s3 + $0xb0] sm:$0xff]
    %v53 = vld [vmem:[%s3 + $0xb8] sm:$0xff]
    %v54 = vld [vmem:[%s3 + $0xc0] sm:$0xff]
    %v55 = vld [vmem:[%s3 + $0xc8] sm:$0xff]
    %v56 = vld [vmem:[%s3 + $0xd0] sm:$0xff]
    %v57 = vld [vmem:[%s3 + $0xd8] sm:$0xff]
    %v58 = vld [vmem:[%s3 + $0xe0] sm:$0xff]
    %v59 = vld [vmem:[%s3 + $0xe8] sm:$0xff]
    %v60 = vld [vmem:[%s3 + $0xf0] sm:$0xff]
    %v61 = vld [vmem:[%s3 + $0xf8] sm:$0xff]
    %v62 = vld [vmem:[%s3 + $0x100] sm:$0xff]
    %v63 = vld [vmem:[%s3 + $0x108] sm:$0xff]
    %v64 = vld [vmem:[%s3 + $0x110] sm:$0xff]
    %v65 = vld [vmem:[%s3 + $0x118] sm:$0xff]
    %v66 = vld [vmem:[%s3 + $0x120] sm:$0xff]
    %v67 = vld [vmem:[%s3 + $0x128] sm:$0xff]
    %v68 = vld [vmem:[%s3 + $0x130] sm:$0xff]
    %v69 = vld [vmem:[%s3 + $0x138] sm:$0xff]
    %v70 = vld [vmem:[%s3 + $0x140] sm:$0xff]
    %v71 = vld [vmem:[%s3 + $0x148] sm:$0xff]
    %v72 = vld [vmem:[%s3 + $0x150] sm:$0xff]
    %v73 = vld [vmem:[%s3 + $0x158] sm:$0xff]
    %v74 = vld [vmem:[%s3 + $0x160] sm:$0xff]
    %v75 = vld [vmem:[%s3 + $0x168] sm:$0xff]
    %v76 = vld [vmem:[%s3 + $0x170] sm:$0xff]
    %v77 = vld [vmem:[%s3 + $0x178] sm:$0xff]
    %v78 = vld [vmem:[%s3 + $0x180] sm:$0xff]
    %v79 = vld [vmem:[%s3 + $0x188] sm:$0xff]
    %v80 = vld [vmem:[%s3 + $0x190] sm:$0xff]
    %v81 = vld [vmem:[%s3 + $0x198] sm:$0xff]
    %v82 = vld [vmem:[%s3 + $0x1a0] sm:$0xff]
    %v83 = vld [vmem:[%s3 + $0x1a8] sm:$0xff]
    %v84 = vld [vmem:[%s3 + $0x1b0] sm:$0xff]
    %v85 = vld [vmem:[%s3 + $0x1b8] sm:$0xff]
    %v86 = vld [vmem:[%s3 + $0x1c0] sm:$0xff]
    %v87 = vld [vmem:[%s3 + $0x1c8] sm:$0xff]
    %v88 = vld [vmem:[%s3 + $0x1d0] sm:$0xff]
    %v89 = vld [vmem:[%s3 + $0x1d8] sm:$0xff]
    %v90 = vld [vmem:[%s3 + $0x1e0] sm:$0xff]
    %v91 = vld [vmem:[%s3 + $0x1e8] sm:$0xff]
    %v92 = vld [vmem:[%s3 + $0x1f0] sm:$0xff]
    %v93 = vld [vmem:[%s3 + $0x1f8] sm:$0xff]
    %v94 = vld [vmem:[%s3 + $0x200] sm:$0xff]
    %v95 = vld [vmem:[%s3 + $0x208] sm:$0xff]
    %v96 = vld [vmem:[%s3 + $0x210] sm:$0xff]
    %v97 = vld [vmem:[%s3 + $0x218] sm:$0xff]
    %v98 = vld [vmem:[%s3 + $0x220] sm:$0xff]
    %v99 = vld [vmem:[%s3 + $0x228] sm:$0xff]
    %v100 = vld [vmem:[%s3 + $0x230] sm:$0xff]
    %v101 = vld [vmem:[%s3 + $0x238] sm:$0xff]
    %v102 = vld [vmem:[%s3 + $0x240] sm:$0xff]
    %v103 = vld [vmem:[%s3 + $0x248] sm:$0xff]
    %v104 = vld [vmem:[%s3 + $0x250] sm:$0xff]
    %v105 = vld [vmem:[%s3 + $0x258] sm:$0xff]
    %v106 = vld [vmem:[%s3 + $0x260] sm:$0xff]
    %v107 = vld [vmem:[%s3 + $0x268] sm:$0xff]
    %v108 = vld [vmem:[%s3 + $0x270] sm:$0xff]
    %v109 = vld [vmem:[%s3 + $0x278] sm:$0xff]
    %v110 = vld [vmem:[%s3 + $0x280] sm:$0xff]
    %v111 = vld [vmem:[%s3 + $0x288] sm:$0xff]
    %v112 = vld [vmem:[%s3 + $0x290] sm:$0xff]
    %v113 = vld [vmem:[%s3 + $0x298] sm:$0xff]
    %v114 = vld [vmem:[%s3 + $0x2a0] sm:$0xff]
    %v115 = vld [vmem:[%s3 + $0x2a8] sm:$0xff]
    %v116 = vld [vmem:[%s3 + $0x2b0] sm:$0xff]
    %v117 = vld [vmem:[%s3 + $0x2b8] sm:$0xff]
    %v118 = vld [vmem:[%s3 + $0x2c0] sm:$0xff]
    %v119 = vld [vmem:[%s3 + $0x2c8] sm:$0xff]
    %v120 = vld [vmem:[%s3 + $0x2d0] sm:$0xff]
    %v121 = vld [vmem:[%s3 + $0x2d8] sm:$0xff]
    %v122 = vld [vmem:[%s3 + $0x2e0] sm:$0xff]
    %v123 = vld [vmem:[%s3 + $0x2e8] sm:$0xff]
    %v124 = vld [vmem:[%s3 + $0x2f0] sm:$0xff]
    %v125 = vld [vmem:[%s3 + $0x2f8] sm:$0xff]
    %v126 = vld [vmem:[%s3 + $0x300] sm:$0xff]
    %v127 = vld [vmem:[%s3 + $0x308] sm:$0xff]
    %v128 = vld [vmem:[%s3 + $0x310] sm:$0xff]
    %v129 = vld [vmem:[%s3 + $0x318] sm:$0xff]
    %v130 = vld [vmem:[%s3 + $0x320] sm:$0xff]
    %v131 = vld [vmem:[%s3 + $0x328] sm:$0xff]
    %v132 = vld [vmem:[%s3 + $0x330] sm:$0xff]
    %v133 = vld [vmem:[%s3 + $0x338] sm:$0xff]
    %v134 = vld [vmem:[%s3 + $0x340] sm:$0xff]
    %v135 = vld [vmem:[%s3 + $0x348] sm:$0xff]
    %v136 = vld [vmem:[%s3 + $0x350] sm:$0xff]
    %v137 = vld [vmem:[%s3 + $0x358] sm:$0xff]
    %v138 = vld [vmem:[%s3 + $0x360] sm:$0xff]
    %v139 = vld [vmem:[%s3 + $0x368] sm:$0xff]
    %v140 = vld [vmem:[%s3 + $0x370] sm:$0xff]
    %v141 = vld [vmem:[%s3 + $0x378] sm:$0xff]
    %v142 = vld [vmem:[%s3 + $0x380] sm:$0xff]
    %v143 = vld [vmem:[%s3 + $0x388] sm:$0xff]
    %v144 = vld [vmem:[%s3 + $0x390] sm:$0xff]
    %v145 = vld [vmem:[%s3 + $0x398] sm:$0xff]
    %v146 = vld [vmem:[%s3 + $0x3a0] sm:$0xff]
    %v147 = vld [vmem:[%s3 + $0x3a8] sm:$0xff]
    %v148 = vld [vmem:[%s3 + $0x3b0] sm:$0xff]
    %v149 = vld [vmem:[%s3 + $0x3b8] sm:$0xff]
    %v150 = vld [vmem:[%s3 + $0x3c0] sm:$0xff]
    %v151 = vld [vmem:[%s3 + $0x3c8] sm:$0xff]
    %v152 = vld [vmem:[%s3 + $0x3d0] sm:$0xff]
    %v153 = vld [vmem:[%s3 + $0x3d8] sm:$0xff]
    %v154 = vld [vmem:[%s3 + $0x3e0] sm:$0xff]
    %v155 = vld [vmem:[%s3 + $0x3e8] sm:$0xff]
    %v156 = vld [vmem:[%s3 + $0x3f0] sm:$0xff]
    %v157 = vld [vmem:[%s3 + $0x3f8] sm:$0xff]
    %v158 = vld [vmem:[%s5] sm:$0x1]
    %v160 = vlaneseq
    %v161 = vshrl.u32 %v160, 7
    %v162 = vsub.s32 0, %v161
    %v163 = vrot.slane %v158, %v162
    %v167 = vcombine.high %v28, %v28
    %v169 = vunpack.c.l.s4 1983009808
    %v170 = vunpack.c.0.s8 %v169
    %v171 = vlaneseq
    %v172 = vshrl.u32 %v171, 7
    %v173 = vsub.s32 %v170, %v172
    %v174 = vrot.slane %v28, %v173
    %v176 = vunpack.c.l.s4 1983009808
    %v177 = vunpack.c.0.s8 %v176
    %v178 = vlaneseq
    %v179 = vshrl.u32 %v178, 7
    %v180 = vsub.s32 %v177, %v179
    %v181 = vrot.slane %v167, %v180
    %v182 = vcombine.high %v174, %v174
    %v183 = vcombine.high %v181, %v181
    %v184 = vcombine.high %v29, %v29
    %v186 = vunpack.c.l.s4 1983009808
    %v187 = vunpack.c.0.s8 %v186
    %v188 = vlaneseq
    %v189 = vshrl.u32 %v188, 7
    %v190 = vsub.s32 %v187, %v189
    %v191 = vrot.slane %v29, %v190
    %v193 = vunpack.c.l.s4 1983009808
    %v194 = vunpack.c.0.s8 %v193
    %v195 = vlaneseq
    %v196 = vshrl.u32 %v195, 7
    %v197 = vsub.s32 %v194, %v196
    %v198 = vrot.slane %v184, %v197
    %v199 = vcombine.high %v191, %v191
    %v200 = vcombine.high %v198, %v198
    %209 = vmatprep.subr.mxu0 0.0
    %210 = vmatpush1.msra.mxu0 %v45
    %211 = vmatprep.subr.mxu0 0.0
    %212 = vmatpush1.msra.mxu0 %v44
    %213 = vmatprep.subr.mxu0 0.0
    %214 = vmatpush1.msra.mxu0 %v43
    %215 = vmatprep.subr.mxu0 0.0
    %216 = vmatpush1.msra.mxu0 %v42
    %217 = vmatprep.subr.mxu0 0.0
    %218 = vmatpush1.msra.mxu0 %v41
    %219 = vmatprep.subr.mxu0 0.0
    %220 = vmatpush1.msra.mxu0 %v40
    %221 = vmatprep.subr.mxu0 0.0
    %222 = vmatpush1.msra.mxu0 %v39
    %223 = vmatprep.subr.mxu0 0.0
    %224 = vmatpush1.msra.mxu0 %v38
    %225 = vmatprep.subr.mxu0 0.0
    %226 = vmatpush1.msra.mxu0 %v37
    %227 = vmatprep.subr.mxu0 0.0
    %228 = vmatpush1.msra.mxu0 %v36
    %229 = vmatprep.subr.mxu0 0.0
    %230 = vmatpush1.msra.mxu0 %v35
    %231 = vmatprep.subr.mxu0 0.0
    %232 = vmatpush1.msra.mxu0 %v34
    %233 = vmatprep.subr.mxu0 0.0
    %234 = vmatpush1.msra.mxu0 %v33
    %235 = vmatprep.subr.mxu0 0.0
    %236 = vmatpush1.msra.mxu0 %v32
    %237 = vmatprep.subr.mxu0 0.0
    %238 = vmatpush1.msra.mxu0 %v31
    %239 = vmatprep.subr.mxu0 0.0
    %240 = vmatpush1.msra.mxu0 %v30
    %241 = vmatprep.subr.mxu0 0.0
    %242 = vmatpush2.msra.mxu0 %v61
    %243 = vmatprep.subr.mxu0 0.0
    %244 = vmatpush2.msra.mxu0 %v60
    %245 = vmatprep.subr.mxu0 0.0
    %246 = vmatpush2.msra.mxu0 %v59
    %247 = vmatprep.subr.mxu0 0.0
    %248 = vmatpush2.msra.mxu0 %v58
    %249 = vmatprep.subr.mxu0 0.0
    %250 = vmatpush2.msra.mxu0 %v57
    %251 = vmatprep.subr.mxu0 0.0
    %252 = vmatpush2.msra.mxu0 %v56
    %253 = vmatprep.subr.mxu0 0.0
    %254 = vmatpush2.msra.mxu0 %v55
    %255 = vmatprep.subr.mxu0 0.0
    %256 = vmatpush2.msra.mxu0 %v54
    %257 = vmatprep.subr.mxu0 0.0
    %258 = vmatpush2.msra.mxu0 %v53
    %259 = vmatprep.subr.mxu0 0.0
    %260 = vmatpush2.msra.mxu0 %v52
    %261 = vmatprep.subr.mxu0 0.0
    %262 = vmatpush2.msra.mxu0 %v51
    %263 = vmatprep.subr.mxu0 0.0
    %264 = vmatpush2.msra.mxu0 %v50
    %265 = vmatprep.subr.mxu0 0.0
    %266 = vmatpush2.msra.mxu0 %v49
    %267 = vmatprep.subr.mxu0 0.0
    %268 = vmatpush2.msra.mxu0 %v48
    %269 = vmatprep.subr.mxu0 0.0
    %270 = vmatpush2.msra.mxu0 %v47
    %271 = vmatprep.subr.mxu0 0.0
    %272 = vmatpush2.msra.mxu0 %v46
    %273 = vmatprep.mubr.f32.mxu0 %v182
    %274 = vmatmul.mubr.f32.gmra.mxu0 %v174
    %v275 = vpop.f32.mrf.mxu0
    %v276 = vadd.f32 %v163, %v275
    %v277 = vpop.f32.mrf.mxu0
    %278 = vdwg.mxu0
    %279 = vmatprep.subr.mxu0 0.0
    %280 = vmatpush1.msra.mxu0 %v77
    %281 = vmatprep.subr.mxu0 0.0
    %282 = vmatpush1.msra.mxu0 %v76
    %283 = vmatprep.subr.mxu0 0.0
    %284 = vmatpush1.msra.mxu0 %v75
    %285 = vmatprep.subr.mxu0 0.0
    %286 = vmatpush1.msra.mxu0 %v74
    %287 = vmatprep.subr.mxu0 0.0
    %288 = vmatpush1.msra.mxu0 %v73
    %289 = vmatprep.subr.mxu0 0.0
    %290 = vmatpush1.msra.mxu0 %v72
    %291 = vmatprep.subr.mxu0 0.0
    %292 = vmatpush1.msra.mxu0 %v71
    %293 = vmatprep.subr.mxu0 0.0
    %294 = vmatpush1.msra.mxu0 %v70
    %295 = vmatprep.subr.mxu0 0.0
    %296 = vmatpush1.msra.mxu0 %v69
    %297 = vmatprep.subr.mxu0 0.0
    %298 = vmatpush1.msra.mxu0 %v68
    %299 = vmatprep.subr.mxu0 0.0
    %300 = vmatpush1.msra.mxu0 %v67
    %301 = vmatprep.subr.mxu0 0.0
    %302 = vmatpush1.msra.mxu0 %v66
    %303 = vmatprep.subr.mxu0 0.0
    %304 = vmatpush1.msra.mxu0 %v65
    %305 = vmatprep.subr.mxu0 0.0
    %306 = vmatpush1.msra.mxu0 %v64
    %307 = vmatprep.subr.mxu0 0.0
    %308 = vmatpush1.msra.mxu0 %v63
    %309 = vmatprep.subr.mxu0 0.0
    %310 = vmatpush1.msra.mxu0 %v62
    %311 = vmatprep.subr.mxu0 0.0
    %312 = vmatpush2.msra.mxu0 %v93
    %313 = vmatprep.subr.mxu0 0.0
    %314 = vmatpush2.msra.mxu0 %v92
    %315 = vmatprep.subr.mxu0 0.0
    %316 = vmatpush2.msra.mxu0 %v91
    %317 = vmatprep.subr.mxu0 0.0
    %318 = vmatpush2.msra.mxu0 %v90
    %319 = vmatprep.subr.mxu0 0.0
    %320 = vmatpush2.msra.mxu0 %v89
    %321 = vmatprep.subr.mxu0 0.0
    %322 = vmatpush2.msra.mxu0 %v88
    %323 = vmatprep.subr.mxu0 0.0
    %324 = vmatpush2.msra.mxu0 %v87
    %325 = vmatprep.subr.mxu0 0.0
    %326 = vmatpush2.msra.mxu0 %v86
    %327 = vmatprep.subr.mxu0 0.0
    %328 = vmatpush2.msra.mxu0 %v85
    %329 = vmatprep.subr.mxu0 0.0
    %330 = vmatpush2.msra.mxu0 %v84
    %331 = vmatprep.subr.mxu0 0.0
    %332 = vmatpush2.msra.mxu0 %v83
    %333 = vmatprep.subr.mxu0 0.0
    %334 = vmatpush2.msra.mxu0 %v82
    %335 = vmatprep.subr.mxu0 0.0
    %336 = vmatpush2.msra.mxu0 %v81
    %337 = vmatprep.subr.mxu0 0.0
    %338 = vmatpush2.msra.mxu0 %v80
    %339 = vmatprep.subr.mxu0 0.0
    %340 = vmatpush2.msra.mxu0 %v79
    %341 = vmatprep.subr.mxu0 0.0
    %342 = vmatpush2.msra.mxu0 %v78
    %343 = vmatprep.mubr.f32.mxu0 %v183
    %344 = vmatmul.mubr.f32.gmra.mxu0 %v181
    %v345 = vpop.f32.mrf.mxu0
    %v346 = vadd.f32 %v276, %v345
    %v347 = vpop.f32.mrf.mxu0
    %348 = vdwg.mxu0
    %349 = vmatprep.subr.mxu0 0.0
    %350 = vmatpush1.msra.mxu0 %v109
    %351 = vmatprep.subr.mxu0 0.0
    %352 = vmatpush1.msra.mxu0 %v108
    %353 = vmatprep.subr.mxu0 0.0
    %354 = vmatpush1.msra.mxu0 %v107
    %355 = vmatprep.subr.mxu0 0.0
    %356 = vmatpush1.msra.mxu0 %v106
    %357 = vmatprep.subr.mxu0 0.0
    %358 = vmatpush1.msra.mxu0 %v105
    %359 = vmatprep.subr.mxu0 0.0
    %360 = vmatpush1.msra.mxu0 %v104
    %361 = vmatprep.subr.mxu0 0.0
    %362 = vmatpush1.msra.mxu0 %v103
    %363 = vmatprep.subr.mxu0 0.0
    %364 = vmatpush1.msra.mxu0 %v102
    %365 = vmatprep.subr.mxu0 0.0
    %366 = vmatpush1.msra.mxu0 %v101
    %367 = vmatprep.subr.mxu0 0.0
    %368 = vmatpush1.msra.mxu0 %v100
    %369 = vmatprep.subr.mxu0 0.0
    %370 = vmatpush1.msra.mxu0 %v99
    %371 = vmatprep.subr.mxu0 0.0
    %372 = vmatpush1.msra.mxu0 %v98
    %373 = vmatprep.subr.mxu0 0.0
    %374 = vmatpush1.msra.mxu0 %v97
    %375 = vmatprep.subr.mxu0 0.0
    %376 = vmatpush1.msra.mxu0 %v96
    %377 = vmatprep.subr.mxu0 0.0
    %378 = vmatpush1.msra.mxu0 %v95
    %379 = vmatprep.subr.mxu0 0.0
    %380 = vmatpush1.msra.mxu0 %v94
    %381 = vmatprep.subr.mxu0 0.0
    %382 = vmatpush2.msra.mxu0 %v125
    %383 = vmatprep.subr.mxu0 0.0
    %384 = vmatpush2.msra.mxu0 %v124
    %385 = vmatprep.subr.mxu0 0.0
    %386 = vmatpush2.msra.mxu0 %v123
    %387 = vmatprep.subr.mxu0 0.0
    %388 = vmatpush2.msra.mxu0 %v122
    %389 = vmatprep.subr.mxu0 0.0
    %390 = vmatpush2.msra.mxu0 %v121
    %391 = vmatprep.subr.mxu0 0.0
    %392 = vmatpush2.msra.mxu0 %v120
    %393 = vmatprep.subr.mxu0 0.0
    %394 = vmatpush2.msra.mxu0 %v119
    %395 = vmatprep.subr.mxu0 0.0
    %396 = vmatpush2.msra.mxu0 %v118
    %397 = vmatprep.subr.mxu0 0.0
    %398 = vmatpush2.msra.mxu0 %v117
    %399 = vmatprep.subr.mxu0 0.0
    %400 = vmatpush2.msra.mxu0 %v116
    %401 = vmatprep.subr.mxu0 0.0
    %402 = vmatpush2.msra.mxu0 %v115
    %403 = vmatprep.subr.mxu0 0.0
    %404 = vmatpush2.msra.mxu0 %v114
    %405 = vmatprep.subr.mxu0 0.0
    %406 = vmatpush2.msra.mxu0 %v113
    %407 = vmatprep.subr.mxu0 0.0
    %408 = vmatpush2.msra.mxu0 %v112
    %409 = vmatprep.subr.mxu0 0.0
    %410 = vmatpush2.msra.mxu0 %v111
    %411 = vmatprep.subr.mxu0 0.0
    %412 = vmatpush2.msra.mxu0 %v110
    %413 = vmatprep.mubr.f32.mxu0 %v199
    %414 = vmatmul.mubr.f32.gmra.mxu0 %v191
    %v415 = vpop.f32.mrf.mxu0
    %v416 = vadd.f32 %v346, %v415
    %v417 = vpop.f32.mrf.mxu0
    %418 = vdwg.mxu0
    %419 = vmatprep.subr.mxu0 0.0
    %420 = vmatpush1.msra.mxu0 %v141
    %421 = vmatprep.subr.mxu0 0.0
    %422 = vmatpush1.msra.mxu0 %v140
    %423 = vmatprep.subr.mxu0 0.0
    %424 = vmatpush1.msra.mxu0 %v139
    %425 = vmatprep.subr.mxu0 0.0
    %426 = vmatpush1.msra.mxu0 %v138
    %427 = vmatprep.subr.mxu0 0.0
    %428 = vmatpush1.msra.mxu0 %v137
    %429 = vmatprep.subr.mxu0 0.0
    %430 = vmatpush1.msra.mxu0 %v136
    %431 = vmatprep.subr.mxu0 0.0
    %432 = vmatpush1.msra.mxu0 %v135
    %433 = vmatprep.subr.mxu0 0.0
    %434 = vmatpush1.msra.mxu0 %v134
    %435 = vmatprep.subr.mxu0 0.0
    %436 = vmatpush1.msra.mxu0 %v133
    %437 = vmatprep.subr.mxu0 0.0
    %438 = vmatpush1.msra.mxu0 %v132
    %439 = vmatprep.subr.mxu0 0.0
    %440 = vmatpush1.msra.mxu0 %v131
    %441 = vmatprep.subr.mxu0 0.0
    %442 = vmatpush1.msra.mxu0 %v130
    %443 = vmatprep.subr.mxu0 0.0
    %444 = vmatpush1.msra.mxu0 %v129
    %445 = vmatprep.subr.mxu0 0.0
    %446 = vmatpush1.msra.mxu0 %v128
    %447 = vmatprep.subr.mxu0 0.0
    %448 = vmatpush1.msra.mxu0 %v127
    %449 = vmatprep.subr.mxu0 0.0
    %450 = vmatpush1.msra.mxu0 %v126
    %451 = vmatprep.subr.mxu0 0.0
    %452 = vmatpush2.msra.mxu0 %v157
    %453 = vmatprep.subr.mxu0 0.0
    %454 = vmatpush2.msra.mxu0 %v156
    %455 = vmatprep.subr.mxu0 0.0
    %456 = vmatpush2.msra.mxu0 %v155
    %457 = vmatprep.subr.mxu0 0.0
    %458 = vmatpush2.msra.mxu0 %v154
    %459 = vmatprep.subr.mxu0 0.0
    %460 = vmatpush2.msra.mxu0 %v153
    %461 = vmatprep.subr.mxu0 0.0
    %462 = vmatpush2.msra.mxu0 %v152
    %463 = vmatprep.subr.mxu0 0.0
    %464 = vmatpush2.msra.mxu0 %v151
    %465 = vmatprep.subr.mxu0 0.0
    %466 = vmatpush2.msra.mxu0 %v150
    %467 = vmatprep.subr.mxu0 0.0
    %468 = vmatpush2.msra.mxu0 %v149
    %469 = vmatprep.subr.mxu0 0.0
    %470 = vmatpush2.msra.mxu0 %v148
    %471 = vmatprep.subr.mxu0 0.0
    %472 = vmatpush2.msra.mxu0 %v147
    %473 = vmatprep.subr.mxu0 0.0
    %474 = vmatpush2.msra.mxu0 %v146
    %475 = vmatprep.subr.mxu0 0.0
    %476 = vmatpush2.msra.mxu0 %v145
    %477 = vmatprep.subr.mxu0 0.0
    %478 = vmatpush2.msra.mxu0 %v144
    %479 = vmatprep.subr.mxu0 0.0
    %480 = vmatpush2.msra.mxu0 %v143
    %481 = vmatprep.subr.mxu0 0.0
    %482 = vmatpush2.msra.mxu0 %v142
    %483 = vmatprep.mubr.f32.mxu0 %v200
    %484 = vmatmul.mubr.f32.gmra.mxu0 %v198
    %v485 = vpop.f32.mrf.mxu0
    %v486 = vadd.f32 %v416, %v485
    %v487 = vpop.f32.mrf.mxu0
    %488 = vdwg.mxu0
    %v491 = vcombine.high %v26, %v26
    %v493 = vunpack.c.l.s4 1983009808
    %v494 = vunpack.c.0.s8 %v493
    %v495 = vlaneseq
    %v496 = vshrl.u32 %v495, 7
    %v497 = vsub.s32 %v494, %v496
    %v498 = vrot.slane %v26, %v497
    %v500 = vunpack.c.l.s4 1983009808
    %v501 = vunpack.c.0.s8 %v500
    %v502 = vlaneseq
    %v503 = vshrl.u32 %v502, 7
    %v504 = vsub.s32 %v501, %v503
    %v505 = vrot.slane %v491, %v504
    %v506 = vcombine.high %v498, %v498
    %v507 = vcombine.high %v505, %v505
    %v508 = vcombine.high %v27, %v27
    %v510 = vunpack.c.l.s4 1983009808
    %v511 = vunpack.c.0.s8 %v510
    %v512 = vlaneseq
    %v513 = vshrl.u32 %v512, 7
    %v514 = vsub.s32 %v511, %v513
    %v515 = vrot.slane %v27, %v514
    %v517 = vunpack.c.l.s4 1983009808
    %v518 = vunpack.c.0.s8 %v517
    %v519 = vlaneseq
    %v520 = vshrl.u32 %v519, 7
    %v521 = vsub.s32 %v518, %v520
    %v522 = vrot.slane %v508, %v521
    %v523 = vcombine.high %v515, %v515
    %v524 = vcombine.high %v522, %v522
    %533 = vmatprep.subr.mxu0 0.0
    %534 = vmatpush1.msra.mxu0 %v45
    %535 = vmatprep.subr.mxu0 0.0
    %536 = vmatpush1.msra.mxu0 %v44
    %537 = vmatprep.subr.mxu0 0.0
    %538 = vmatpush1.msra.mxu0 %v43
    %539 = vmatprep.subr.mxu0 0.0
    %540 = vmatpush1.msra.mxu0 %v42
    %541 = vmatprep.subr.mxu0 0.0
    %542 = vmatpush1.msra.mxu0 %v41
    %543 = vmatprep.subr.mxu0 0.0
    %544 = vmatpush1.msra.mxu0 %v40
    %545 = vmatprep.subr.mxu0 0.0
    %546 = vmatpush1.msra.mxu0 %v39
    %547 = vmatprep.subr.mxu0 0.0
    %548 = vmatpush1.msra.mxu0 %v38
    %549 = vmatprep.subr.mxu0 0.0
    %550 = vmatpush1.msra.mxu0 %v37
    %551 = vmatprep.subr.mxu0 0.0
    %552 = vmatpush1.msra.mxu0 %v36
    %553 = vmatprep.subr.mxu0 0.0
    %554 = vmatpush1.msra.mxu0 %v35
    %555 = vmatprep.subr.mxu0 0.0
    %556 = vmatpush1.msra.mxu0 %v34
    %557 = vmatprep.subr.mxu0 0.0
    %558 = vmatpush1.msra.mxu0 %v33
    %559 = vmatprep.subr.mxu0 0.0
    %560 = vmatpush1.msra.mxu0 %v32
    %561 = vmatprep.subr.mxu0 0.0
    %562 = vmatpush1.msra.mxu0 %v31
    %563 = vmatprep.subr.mxu0 0.0
    %564 = vmatpush1.msra.mxu0 %v30
    %565 = vmatprep.subr.mxu0 0.0
    %566 = vmatpush2.msra.mxu0 %v61
    %567 = vmatprep.subr.mxu0 0.0
    %568 = vmatpush2.msra.mxu0 %v60
    %569 = vmatprep.subr.mxu0 0.0
    %570 = vmatpush2.msra.mxu0 %v59
    %571 = vmatprep.subr.mxu0 0.0
    %572 = vmatpush2.msra.mxu0 %v58
    %573 = vmatprep.subr.mxu0 0.0
    %574 = vmatpush2.msra.mxu0 %v57
    %575 = vmatprep.subr.mxu0 0.0
    %576 = vmatpush2.msra.mxu0 %v56
    %577 = vmatprep.subr.mxu0 0.0
    %578 = vmatpush2.msra.mxu0 %v55
    %579 = vmatprep.subr.mxu0 0.0
    %580 = vmatpush2.msra.mxu0 %v54
    %581 = vmatprep.subr.mxu0 0.0
    %582 = vmatpush2.msra.mxu0 %v53
    %583 = vmatprep.subr.mxu0 0.0
    %584 = vmatpush2.msra.mxu0 %v52
    %585 = vmatprep.subr.mxu0 0.0
    %586 = vmatpush2.msra.mxu0 %v51
    %587 = vmatprep.subr.mxu0 0.0
    %588 = vmatpush2.msra.mxu0 %v50
    %589 = vmatprep.subr.mxu0 0.0
    %590 = vmatpush2.msra.mxu0 %v49
    %591 = vmatprep.subr.mxu0 0.0
    %592 = vmatpush2.msra.mxu0 %v48
    %593 = vmatprep.subr.mxu0 0.0
    %594 = vmatpush2.msra.mxu0 %v47
    %595 = vmatprep.subr.mxu0 0.0
    %596 = vmatpush2.msra.mxu0 %v46
    %597 = vmatprep.mubr.f32.mxu0 %v506
    %598 = vmatmul.mubr.f32.gmra.mxu0 %v498
    %v599 = vpop.f32.mrf.mxu0
    %v600 = vadd.f32 %v163, %v599
    %v601 = vpop.f32.mrf.mxu0
    %602 = vdwg.mxu0
    %603 = vmatprep.subr.mxu0 0.0
    %604 = vmatpush1.msra.mxu0 %v77
    %605 = vmatprep.subr.mxu0 0.0
    %606 = vmatpush1.msra.mxu0 %v76
    %607 = vmatprep.subr.mxu0 0.0
    %608 = vmatpush1.msra.mxu0 %v75
    %609 = vmatprep.subr.mxu0 0.0
    %610 = vmatpush1.msra.mxu0 %v74
    %611 = vmatprep.subr.mxu0 0.0
    %612 = vmatpush1.msra.mxu0 %v73
    %613 = vmatprep.subr.mxu0 0.0
    %614 = vmatpush1.msra.mxu0 %v72
    %615 = vmatprep.subr.mxu0 0.0
    %616 = vmatpush1.msra.mxu0 %v71
    %617 = vmatprep.subr.mxu0 0.0
    %618 = vmatpush1.msra.mxu0 %v70
    %619 = vmatprep.subr.mxu0 0.0
    %620 = vmatpush1.msra.mxu0 %v69
    %621 = vmatprep.subr.mxu0 0.0
    %622 = vmatpush1.msra.mxu0 %v68
    %623 = vmatprep.subr.mxu0 0.0
    %624 = vmatpush1.msra.mxu0 %v67
    %625 = vmatprep.subr.mxu0 0.0
    %626 = vmatpush1.msra.mxu0 %v66
    %627 = vmatprep.subr.mxu0 0.0
    %628 = vmatpush1.msra.mxu0 %v65
    %629 = vmatprep.subr.mxu0 0.0
    %630 = vmatpush1.msra.mxu0 %v64
    %631 = vmatprep.subr.mxu0 0.0
    %632 = vmatpush1.msra.mxu0 %v63
    %633 = vmatprep.subr.mxu0 0.0
    %634 = vmatpush1.msra.mxu0 %v62
    %635 = vmatprep.subr.mxu0 0.0
    %636 = vmatpush2.msra.mxu0 %v93
    %637 = vmatprep.subr.mxu0 0.0
    %638 = vmatpush2.msra.mxu0 %v92
    %639 = vmatprep.subr.mxu0 0.0
    %640 = vmatpush2.msra.mxu0 %v91
    %641 = vmatprep.subr.mxu0 0.0
    %642 = vmatpush2.msra.mxu0 %v90
    %643 = vmatprep.subr.mxu0 0.0
    %644 = vmatpush2.msra.mxu0 %v89
    %645 = vmatprep.subr.mxu0 0.0
    %646 = vmatpush2.msra.mxu0 %v88
    %647 = vmatprep.subr.mxu0 0.0
    %648 = vmatpush2.msra.mxu0 %v87
    %649 = vmatprep.subr.mxu0 0.0
    %650 = vmatpush2.msra.mxu0 %v86
    %651 = vmatprep.subr.mxu0 0.0
    %652 = vmatpush2.msra.mxu0 %v85
    %653 = vmatprep.subr.mxu0 0.0
    %654 = vmatpush2.msra.mxu0 %v84
    %655 = vmatprep.subr.mxu0 0.0
    %656 = vmatpush2.msra.mxu0 %v83
    %657 = vmatprep.subr.mxu0 0.0
    %658 = vmatpush2.msra.mxu0 %v82
    %659 = vmatprep.subr.mxu0 0.0
    %660 = vmatpush2.msra.mxu0 %v81
    %661 = vmatprep.subr.mxu0 0.0
    %662 = vmatpush2.msra.mxu0 %v80
    %663 = vmatprep.subr.mxu0 0.0
    %664 = vmatpush2.msra.mxu0 %v79
    %665 = vmatprep.subr.mxu0 0.0
    %666 = vmatpush2.msra.mxu0 %v78
    %667 = vmatprep.mubr.f32.mxu0 %v507
    %668 = vmatmul.mubr.f32.gmra.mxu0 %v505
    %v669 = vpop.f32.mrf.mxu0
    %v670 = vadd.f32 %v600, %v669
    %v671 = vpop.f32.mrf.mxu0
    %672 = vdwg.mxu0
    %673 = vmatprep.subr.mxu0 0.0
    %674 = vmatpush1.msra.mxu0 %v109
    %675 = vmatprep.subr.mxu0 0.0
    %676 = vmatpush1.msra.mxu0 %v108
    %677 = vmatprep.subr.mxu0 0.0
    %678 = vmatpush1.msra.mxu0 %v107
    %679 = vmatprep.subr.mxu0 0.0
    %680 = vmatpush1.msra.mxu0 %v106
    %681 = vmatprep.subr.mxu0 0.0
    %682 = vmatpush1.msra.mxu0 %v105
    %683 = vmatprep.subr.mxu0 0.0
    %684 = vmatpush1.msra.mxu0 %v104
    %685 = vmatprep.subr.mxu0 0.0
    %686 = vmatpush1.msra.mxu0 %v103
    %687 = vmatprep.subr.mxu0 0.0
    %688 = vmatpush1.msra.mxu0 %v102
    %689 = vmatprep.subr.mxu0 0.0
    %690 = vmatpush1.msra.mxu0 %v101
    %691 = vmatprep.subr.mxu0 0.0
    %692 = vmatpush1.msra.mxu0 %v100
    %693 = vmatprep.subr.mxu0 0.0
    %694 = vmatpush1.msra.mxu0 %v99
    %695 = vmatprep.subr.mxu0 0.0
    %696 = vmatpush1.msra.mxu0 %v98
    %697 = vmatprep.subr.mxu0 0.0
    %698 = vmatpush1.msra.mxu0 %v97
    %699 = vmatprep.subr.mxu0 0.0
    %700 = vmatpush1.msra.mxu0 %v96
    %701 = vmatprep.subr.mxu0 0.0
    %702 = vmatpush1.msra.mxu0 %v95
    %703 = vmatprep.subr.mxu0 0.0
    %704 = vmatpush1.msra.mxu0 %v94
    %705 = vmatprep.subr.mxu0 0.0
    %706 = vmatpush2.msra.mxu0 %v125
    %707 = vmatprep.subr.mxu0 0.0
    %708 = vmatpush2.msra.mxu0 %v124
    %709 = vmatprep.subr.mxu0 0.0
    %710 = vmatpush2.msra.mxu0 %v123
    %711 = vmatprep.subr.mxu0 0.0
    %712 = vmatpush2.msra.mxu0 %v122
    %713 = vmatprep.subr.mxu0 0.0
    %714 = vmatpush2.msra.mxu0 %v121
    %715 = vmatprep.subr.mxu0 0.0
    %716 = vmatpush2.msra.mxu0 %v120
    %717 = vmatprep.subr.mxu0 0.0
    %718 = vmatpush2.msra.mxu0 %v119
    %719 = vmatprep.subr.mxu0 0.0
    %720 = vmatpush2.msra.mxu0 %v118
    %721 = vmatprep.subr.mxu0 0.0
    %722 = vmatpush2.msra.mxu0 %v117
    %723 = vmatprep.subr.mxu0 0.0
    %724 = vmatpush2.msra.mxu0 %v116
    %725 = vmatprep.subr.mxu0 0.0
    %726 = vmatpush2.msra.mxu0 %v115
    %727 = vmatprep.subr.mxu0 0.0
    %728 = vmatpush2.msra.mxu0 %v114
    %729 = vmatprep.subr.mxu0 0.0
    %730 = vmatpush2.msra.mxu0 %v113
    %731 = vmatprep.subr.mxu0 0.0
    %732 = vmatpush2.msra.mxu0 %v112
    %733 = vmatprep.subr.mxu0 0.0
    %734 = vmatpush2.msra.mxu0 %v111
    %735 = vmatprep.subr.mxu0 0.0
    %736 = vmatpush2.msra.mxu0 %v110
    %737 = vmatprep.mubr.f32.mxu0 %v523
    %738 = vmatmul.mubr.f32.gmra.mxu0 %v515
    %v739 = vpop.f32.mrf.mxu0
    %v740 = vadd.f32 %v670, %v739
    %v741 = vpop.f32.mrf.mxu0
    %742 = vdwg.mxu0
    %743 = vmatprep.subr.mxu0 0.0
    %744 = vmatpush1.msra.mxu0 %v141
    %745 = vmatprep.subr.mxu0 0.0
    %746 = vmatpush1.msra.mxu0 %v140
    %747 = vmatprep.subr.mxu0 0.0
    %748 = vmatpush1.msra.mxu0 %v139
    %749 = vmatprep.subr.mxu0 0.0
    %750 = vmatpush1.msra.mxu0 %v138
    %751 = vmatprep.subr.mxu0 0.0
    %752 = vmatpush1.msra.mxu0 %v137
    %753 = vmatprep.subr.mxu0 0.0
    %754 = vmatpush1.msra.mxu0 %v136
    %755 = vmatprep.subr.mxu0 0.0
    %756 = vmatpush1.msra.mxu0 %v135
    %757 = vmatprep.subr.mxu0 0.0
    %758 = vmatpush1.msra.mxu0 %v134
    %759 = vmatprep.subr.mxu0 0.0
    %760 = vmatpush1.msra.mxu0 %v133
    %761 = vmatprep.subr.mxu0 0.0
    %762 = vmatpush1.msra.mxu0 %v132
    %763 = vmatprep.subr.mxu0 0.0
    %764 = vmatpush1.msra.mxu0 %v131
    %765 = vmatprep.subr.mxu0 0.0
    %766 = vmatpush1.msra.mxu0 %v130
    %767 = vmatprep.subr.mxu0 0.0
    %768 = vmatpush1.msra.mxu0 %v129
    %769 = vmatprep.subr.mxu0 0.0
    %770 = vmatpush1.msra.mxu0 %v128
    %771 = vmatprep.subr.mxu0 0.0
    %772 = vmatpush1.msra.mxu0 %v127
    %773 = vmatprep.subr.mxu0 0.0
    %774 = vmatpush1.msra.mxu0 %v126
    %775 = vmatprep.subr.mxu0 0.0
    %776 = vmatpush2.msra.mxu0 %v157
    %777 = vmatprep.subr.mxu0 0.0
    %778 = vmatpush2.msra.mxu0 %v156
    %779 = vmatprep.subr.mxu0 0.0
    %780 = vmatpush2.msra.mxu0 %v155
    %781 = vmatprep.subr.mxu0 0.0
    %782 = vmatpush2.msra.mxu0 %v154
    %783 = vmatprep.subr.mxu0 0.0
    %784 = vmatpush2.msra.mxu0 %v153
    %785 = vmatprep.subr.mxu0 0.0
    %786 = vmatpush2.msra.mxu0 %v152
    %787 = vmatprep.subr.mxu0 0.0
    %788 = vmatpush2.msra.mxu0 %v151
    %789 = vmatprep.subr.mxu0 0.0
    %790 = vmatpush2.msra.mxu0 %v150
    %791 = vmatprep.subr.mxu0 0.0
    %792 = vmatpush2.msra.mxu0 %v149
    %793 = vmatprep.subr.mxu0 0.0
    %794 = vmatpush2.msra.mxu0 %v148
    %795 = vmatprep.subr.mxu0 0.0
    %796 = vmatpush2.msra.mxu0 %v147
    %797 = vmatprep.subr.mxu0 0.0
    %798 = vmatpush2.msra.mxu0 %v146
    %799 = vmatprep.subr.mxu0 0.0
    %800 = vmatpush2.msra.mxu0 %v145
    %801 = vmatprep.subr.mxu0 0.0
    %802 = vmatpush2.msra.mxu0 %v144
    %803 = vmatprep.subr.mxu0 0.0
    %804 = vmatpush2.msra.mxu0 %v143
    %805 = vmatprep.subr.mxu0 0.0
    %806 = vmatpush2.msra.mxu0 %v142
    %807 = vmatprep.mubr.f32.mxu0 %v524
    %808 = vmatmul.mubr.f32.gmra.mxu0 %v522
    %v809 = vpop.f32.mrf.mxu0
    %v810 = vadd.f32 %v740, %v809
    %v811 = vpop.f32.mrf.mxu0
    %812 = vdwg.mxu0
    %v813 = vsub.f32 %v810, %v486
    %s814 = sld [smem:[#allocation3]]
    %v815 = vlaneseq
    %v816 = vshrl.u32 %v815, 7
    %v817 = vstv %s814
    %vm818 = vcmp.eq.s32.totalorder %v816, %v817
    %v819 = vld [vmem:[%s6] sm:$0xff]
    %v820 = vsel %vm818, %v819, 0.0
    %vm821 = vcmask 261120
    %v822 = vsel %vm821, %v820, 0.0
    %v823 = vrot.slane %v822, 4
    %v824 = vadd.f32 %v822, %v823
    %v825 = vrot.slane %v824, 2
    %v826 = vadd.f32 %v824, %v825
    %v827 = vrot.slane %v826, 1
    %v828 = vadd.f32 %v826, %v827
    %v829 = vmul.f32 %v828, 0.5
    %v830 = vmul.f32 %v813, 0.11111111
    %v831 = vadd.f32 %v486, %v830
    %vm832 = vcmp.gt.f32.partialorder %v831, 0.0
    %v833 = vsel %vm832, 0.11111111, 0.0
    %v834 = vadd.f32 %v833, 0.0
    %v835 = vmul.f32 %v813, 0.22222222
    %v836 = vadd.f32 %v486, %v835
    %vm837 = vcmp.gt.f32.partialorder %v836, 0.0
    %v838 = vsel %vm837, 0.22222222, 0.0
    %v839 = vadd.f32 %v834, %v838
    %v840 = vmul.f32 %v813, 0.33333334
    %v841 = vadd.f32 %v486, %v840
    %vm842 = vcmp.gt.f32.partialorder %v841, 0.0
    %v843 = vsel %vm842, 0.33333334, 0.0
    %v844 = vadd.f32 %v839, %v843
    %v845 = vmul.f32 %v813, 0.44444445
    %v846 = vadd.f32 %v486, %v845
    %vm847 = vcmp.gt.f32.partialorder %v846, 0.0
    %v848 = vsel %vm847, 0.44444445, 0.0
    %v849 = vadd.f32 %v844, %v848
    %v850 = vmul.f32 %v813, 0.5555556
    %v851 = vadd.f32 %v486, %v850
    %vm852 = vcmp.gt.f32.partialorder %v851, 0.0
    %v853 = vsel %vm852, 0.5555556, 0.0
    %v854 = vadd.f32 %v849, %v853
    %v855 = vmul.f32 %v813, 0.6666667
    %v856 = vadd.f32 %v486, %v855
    %vm857 = vcmp.gt.f32.partialorder %v856, 0.0
    %v858 = vsel %vm857, 0.6666667, 0.0
    %v859 = vadd.f32 %v854, %v858
    %v860 = vmul.f32 %v813, 0.7777778
    %v861 = vadd.f32 %v486, %v860
    %vm862 = vcmp.gt.f32.partialorder %v861, 0.0
    %v863 = vsel %vm862, 0.7777778, 0.0
    %v864 = vadd.f32 %v859, %v863
    %v865 = vmul.f32 %v813, 0.8888889
    %v866 = vadd.f32 %v486, %v865
    %vm867 = vcmp.gt.f32.partialorder %v866, 0.0
    %v868 = vsel %vm867, 0.8888889, 0.0
    %v869 = vadd.f32 %v864, %v868
    %v870 = vadd.f32 %v486, %v813
    %vm871 = vcmp.gt.f32.partialorder %v870, 0.0
    %v872 = vsel %vm871, 1.0, 0.0
    %v873 = vadd.f32 %v869, %v872
    %v874 = vmul.f32 %v873, %v829
    %v875 = vld [vmem:[%s4] sm:$0xff]
    %v876 = vld [vmem:[%s4 + $0x8] sm:$0xff]
    %v877 = vld [vmem:[%s4 + $0x10] sm:$0xff]
    %v878 = vld [vmem:[%s4 + $0x18] sm:$0xff]
    %v879 = vld [vmem:[%s4 + $0x20] sm:$0xff]
    %v880 = vld [vmem:[%s4 + $0x28] sm:$0xff]
    %v881 = vld [vmem:[%s4 + $0x30] sm:$0xff]
    %v882 = vld [vmem:[%s4 + $0x38] sm:$0xff]
    %v883 = vld [vmem:[%s4 + $0x40] sm:$0xff]
    %v884 = vld [vmem:[%s4 + $0x48] sm:$0xff]
    %v885 = vld [vmem:[%s4 + $0x50] sm:$0xff]
    %v886 = vld [vmem:[%s4 + $0x58] sm:$0xff]
    %v887 = vld [vmem:[%s4 + $0x60] sm:$0xff]
    %v888 = vld [vmem:[%s4 + $0x68] sm:$0xff]
    %v889 = vld [vmem:[%s4 + $0x70] sm:$0xff]
    %v890 = vld [vmem:[%s4 + $0x78] sm:$0xff]
    %v891 = vld [vmem:[%s4 + $0x80] sm:$0xff]
    %v892 = vld [vmem:[%s4 + $0x88] sm:$0xff]
    %v893 = vld [vmem:[%s4 + $0x90] sm:$0xff]
    %v894 = vld [vmem:[%s4 + $0x98] sm:$0xff]
    %v895 = vld [vmem:[%s4 + $0xa0] sm:$0xff]
    %v896 = vld [vmem:[%s4 + $0xa8] sm:$0xff]
    %v897 = vld [vmem:[%s4 + $0xb0] sm:$0xff]
    %v898 = vld [vmem:[%s4 + $0xb8] sm:$0xff]
    %v899 = vld [vmem:[%s4 + $0xc0] sm:$0xff]
    %v900 = vld [vmem:[%s4 + $0xc8] sm:$0xff]
    %v901 = vld [vmem:[%s4 + $0xd0] sm:$0xff]
    %v902 = vld [vmem:[%s4 + $0xd8] sm:$0xff]
    %v903 = vld [vmem:[%s4 + $0xe0] sm:$0xff]
    %v904 = vld [vmem:[%s4 + $0xe8] sm:$0xff]
    %v905 = vld [vmem:[%s4 + $0xf0] sm:$0xff]
    %v906 = vld [vmem:[%s4 + $0xf8] sm:$0xff]
    %v908 = vsel %vm821, %v874, 0
    %910 = vmatprep.subr.mxu0 0.0
    %911 = vmatpush1.msra.mxu0 0.0
    %912 = vmatprep.subr.mxu0 0.0
    %913 = vmatpush1.msra.mxu0 0.0
    %914 = vmatprep.subr.mxu0 0.0
    %915 = vmatpush1.msra.mxu0 0.0
    %916 = vmatprep.subr.mxu0 0.0
    %917 = vmatpush1.msra.mxu0 0.0
    %918 = vmatprep.subr.mxu0 0.0
    %919 = vmatpush1.msra.mxu0 0.0
    %920 = vmatprep.subr.mxu0 0.0
    %921 = vmatpush1.msra.mxu0 0.0
    %922 = vmatprep.subr.mxu0 0.0
    %923 = vmatpush1.msra.mxu0 0.0
    %924 = vmatprep.subr.mxu0 0.0
    %925 = vmatpush1.msra.mxu0 0.0
    %926 = vmatprep.subr.mxu0 0.0
    %927 = vmatpush1.msra.mxu0 0.0
    %928 = vmatprep.subr.mxu0 0.0
    %929 = vmatpush1.msra.mxu0 0.0
    %930 = vmatprep.subr.mxu0 0.0
    %931 = vmatpush1.msra.mxu0 0.0
    %932 = vmatprep.subr.mxu0 0.0
    %933 = vmatpush1.msra.mxu0 0.0
    %934 = vmatprep.subr.mxu0 %v900
    %935 = vmatpush1.msra.mxu0 %v899
    %936 = vmatprep.subr.mxu0 %v892
    %937 = vmatpush1.msra.mxu0 %v891
    %938 = vmatprep.subr.mxu0 %v884
    %939 = vmatpush1.msra.mxu0 %v883
    %940 = vmatprep.subr.mxu0 %v876
    %941 = vmatpush1.msra.mxu0 %v875
    %942 = vmatprep.subr.mxu0 0.0
    %943 = vmatpush2.msra.mxu0 0.0
    %944 = vmatprep.subr.mxu0 0.0
    %945 = vmatpush2.msra.mxu0 0.0
    %946 = vmatprep.subr.mxu0 0.0
    %947 = vmatpush2.msra.mxu0 0.0
    %948 = vmatprep.subr.mxu0 0.0
    %949 = vmatpush2.msra.mxu0 0.0
    %950 = vmatprep.subr.mxu0 0.0
    %951 = vmatpush2.msra.mxu0 0.0
    %952 = vmatprep.subr.mxu0 0.0
    %953 = vmatpush2.msra.mxu0 0.0
    %954 = vmatprep.subr.mxu0 0.0
    %955 = vmatpush2.msra.mxu0 0.0
    %956 = vmatprep.subr.mxu0 0.0
    %957 = vmatpush2.msra.mxu0 0.0
    %958 = vmatprep.subr.mxu0 0.0
    %959 = vmatpush2.msra.mxu0 0.0
    %960 = vmatprep.subr.mxu0 0.0
    %961 = vmatpush2.msra.mxu0 0.0
    %962 = vmatprep.subr.mxu0 0.0
    %963 = vmatpush2.msra.mxu0 0.0
    %964 = vmatprep.subr.mxu0 0.0
    %965 = vmatpush2.msra.mxu0 0.0
    %966 = vmatprep.subr.mxu0 0.0
    %967 = vmatpush2.msra.mxu0 0.0
    %968 = vmatprep.subr.mxu0 0.0
    %969 = vmatpush2.msra.mxu0 0.0
    %970 = vmatprep.subr.mxu0 0.0
    %971 = vmatpush2.msra.mxu0 0.0
    %972 = vmatprep.subr.mxu0 0.0
    %973 = vmatpush2.msra.mxu0 0.0
    %974 = vmatprep.mubr.f32.mxu0 0.0
    %975 = vmatmul.mubr.f32.gmra.mxu0 %v908
    %v976 = vpop.f32.mrf.mxu0
    %v977 = vadd.f32 0.0, %v976
    %v978 = vpop.f32.mrf.mxu0
    %v979 = vadd.f32 0.0, %v978
    %980 = vdwg.mxu0
    %981 = vmatprep.subr.mxu0 0.0
    %982 = vmatpush1.msra.mxu0 0.0
    %983 = vmatprep.subr.mxu0 0.0
    %984 = vmatpush1.msra.mxu0 0.0
    %985 = vmatprep.subr.mxu0 0.0
    %986 = vmatpush1.msra.mxu0 0.0
    %987 = vmatprep.subr.mxu0 0.0
    %988 = vmatpush1.msra.mxu0 0.0
    %989 = vmatprep.subr.mxu0 0.0
    %990 = vmatpush1.msra.mxu0 0.0
    %991 = vmatprep.subr.mxu0 0.0
    %992 = vmatpush1.msra.mxu0 0.0
    %993 = vmatprep.subr.mxu0 0.0
    %994 = vmatpush1.msra.mxu0 0.0
    %995 = vmatprep.subr.mxu0 0.0
    %996 = vmatpush1.msra.mxu0 0.0
    %997 = vmatprep.subr.mxu0 0.0
    %998 = vmatpush1.msra.mxu0 0.0
    %999 = vmatprep.subr.mxu0 0.0
    %1000 = vmatpush1.msra.mxu0 0.0
    %1001 = vmatprep.subr.mxu0 0.0
    %1002 = vmatpush1.msra.mxu0 0.0
    %1003 = vmatprep.subr.mxu0 0.0
    %1004 = vmatpush1.msra.mxu0 0.0
    %1005 = vmatprep.subr.mxu0 %v902
    %1006 = vmatpush1.msra.mxu0 %v901
    %1007 = vmatprep.subr.mxu0 %v894
    %1008 = vmatpush1.msra.mxu0 %v893
    %1009 = vmatprep.subr.mxu0 %v886
    %1010 = vmatpush1.msra.mxu0 %v885
    %1011 = vmatprep.subr.mxu0 %v878
    %1012 = vmatpush1.msra.mxu0 %v877
    %1013 = vmatprep.subr.mxu0 0.0
    %1014 = vmatpush2.msra.mxu0 0.0
    %1015 = vmatprep.subr.mxu0 0.0
    %1016 = vmatpush2.msra.mxu0 0.0
    %1017 = vmatprep.subr.mxu0 0.0
    %1018 = vmatpush2.msra.mxu0 0.0
    %1019 = vmatprep.subr.mxu0 0.0
    %1020 = vmatpush2.msra.mxu0 0.0
    %1021 = vmatprep.subr.mxu0 0.0
    %1022 = vmatpush2.msra.mxu0 0.0
    %1023 = vmatprep.subr.mxu0 0.0
    %1024 = vmatpush2.msra.mxu0 0.0
    %1025 = vmatprep.subr.mxu0 0.0
    %1026 = vmatpush2.msra.mxu0 0.0
    %1027 = vmatprep.subr.mxu0 0.0
    %1028 = vmatpush2.msra.mxu0 0.0
    %1029 = vmatprep.subr.mxu0 0.0
    %1030 = vmatpush2.msra.mxu0 0.0
    %1031 = vmatprep.subr.mxu0 0.0
    %1032 = vmatpush2.msra.mxu0 0.0
    %1033 = vmatprep.subr.mxu0 0.0
    %1034 = vmatpush2.msra.mxu0 0.0
    %1035 = vmatprep.subr.mxu0 0.0
    %1036 = vmatpush2.msra.mxu0 0.0
    %1037 = vmatprep.subr.mxu0 0.0
    %1038 = vmatpush2.msra.mxu0 0.0
    %1039 = vmatprep.subr.mxu0 0.0
    %1040 = vmatpush2.msra.mxu0 0.0
    %1041 = vmatprep.subr.mxu0 0.0
    %1042 = vmatpush2.msra.mxu0 0.0
    %1043 = vmatprep.subr.mxu0 0.0
    %1044 = vmatpush2.msra.mxu0 0.0
    %1045 = vmatprep.mubr.f32.mxu0 0.0
    %1046 = vmatmul.mubr.f32.gmra.mxu0 %v908
    %v1047 = vpop.f32.mrf.mxu0
    %v1048 = vadd.f32 0.0, %v1047
    %v1049 = vpop.f32.mrf.mxu0
    %v1050 = vadd.f32 0.0, %v1049
    %1051 = vdwg.mxu0
    %1052 = vmatprep.subr.mxu0 0.0
    %1053 = vmatpush1.msra.mxu0 0.0
    %1054 = vmatprep.subr.mxu0 0.0
    %1055 = vmatpush1.msra.mxu0 0.0
    %1056 = vmatprep.subr.mxu0 0.0
    %1057 = vmatpush1.msra.mxu0 0.0
    %1058 = vmatprep.subr.mxu0 0.0
    %1059 = vmatpush1.msra.mxu0 0.0
    %1060 = vmatprep.subr.mxu0 0.0
    %1061 = vmatpush1.msra.mxu0 0.0
    %1062 = vmatprep.subr.mxu0 0.0
    %1063 = vmatpush1.msra.mxu0 0.0
    %1064 = vmatprep.subr.mxu0 0.0
    %1065 = vmatpush1.msra.mxu0 0.0
    %1066 = vmatprep.subr.mxu0 0.0
    %1067 = vmatpush1.msra.mxu0 0.0
    %1068 = vmatprep.subr.mxu0 0.0
    %1069 = vmatpush1.msra.mxu0 0.0
    %1070 = vmatprep.subr.mxu0 0.0
    %1071 = vmatpush1.msra.mxu0 0.0
    %1072 = vmatprep.subr.mxu0 0.0
    %1073 = vmatpush1.msra.mxu0 0.0
    %1074 = vmatprep.subr.mxu0 0.0
    %1075 = vmatpush1.msra.mxu0 0.0
    %1076 = vmatprep.subr.mxu0 %v904
    %1077 = vmatpush1.msra.mxu0 %v903
    %1078 = vmatprep.subr.mxu0 %v896
    %1079 = vmatpush1.msra.mxu0 %v895
    %1080 = vmatprep.subr.mxu0 %v888
    %1081 = vmatpush1.msra.mxu0 %v887
    %1082 = vmatprep.subr.mxu0 %v880
    %1083 = vmatpush1.msra.mxu0 %v879
    %1084 = vmatprep.subr.mxu0 0.0
    %1085 = vmatpush2.msra.mxu0 0.0
    %1086 = vmatprep.subr.mxu0 0.0
    %1087 = vmatpush2.msra.mxu0 0.0
    %1088 = vmatprep.subr.mxu0 0.0
    %1089 = vmatpush2.msra.mxu0 0.0
    %1090 = vmatprep.subr.mxu0 0.0
    %1091 = vmatpush2.msra.mxu0 0.0
    %1092 = vmatprep.subr.mxu0 0.0
    %1093 = vmatpush2.msra.mxu0 0.0
    %1094 = vmatprep.subr.mxu0 0.0
    %1095 = vmatpush2.msra.mxu0 0.0
    %1096 = vmatprep.subr.mxu0 0.0
    %1097 = vmatpush2.msra.mxu0 0.0
    %1098 = vmatprep.subr.mxu0 0.0
    %1099 = vmatpush2.msra.mxu0 0.0
    %1100 = vmatprep.subr.mxu0 0.0
    %1101 = vmatpush2.msra.mxu0 0.0
    %1102 = vmatprep.subr.mxu0 0.0
    %1103 = vmatpush2.msra.mxu0 0.0
    %1104 = vmatprep.subr.mxu0 0.0
    %1105 = vmatpush2.msra.mxu0 0.0
    %1106 = vmatprep.subr.mxu0 0.0
    %1107 = vmatpush2.msra.mxu0 0.0
    %1108 = vmatprep.subr.mxu0 0.0
    %1109 = vmatpush2.msra.mxu0 0.0
    %1110 = vmatprep.subr.mxu0 0.0
    %1111 = vmatpush2.msra.mxu0 0.0
    %1112 = vmatprep.subr.mxu0 0.0
    %1113 = vmatpush2.msra.mxu0 0.0
    %1114 = vmatprep.subr.mxu0 0.0
    %1115 = vmatpush2.msra.mxu0 0.0
    %1116 = vmatprep.mubr.f32.mxu0 0.0
    %1117 = vmatmul.mubr.f32.gmra.mxu0 %v908
    %v1118 = vpop.f32.mrf.mxu0
    %v1119 = vadd.f32 0.0, %v1118
    %v1120 = vpop.f32.mrf.mxu0
    %v1121 = vadd.f32 0.0, %v1120
    %1122 = vdwg.mxu0
    %1123 = vmatprep.subr.mxu0 0.0
    %1124 = vmatpush1.msra.mxu0 0.0
    %1125 = vmatprep.subr.mxu0 0.0
    %1126 = vmatpush1.msra.mxu0 0.0
    %1127 = vmatprep.subr.mxu0 0.0
    %1128 = vmatpush1.msra.mxu0 0.0
    %1129 = vmatprep.subr.mxu0 0.0
    %1130 = vmatpush1.msra.mxu0 0.0
    %1131 = vmatprep.subr.mxu0 0.0
    %1132 = vmatpush1.msra.mxu0 0.0
    %1133 = vmatprep.subr.mxu0 0.0
    %1134 = vmatpush1.msra.mxu0 0.0
    %1135 = vmatprep.subr.mxu0 0.0
    %1136 = vmatpush1.msra.mxu0 0.0
    %1137 = vmatprep.subr.mxu0 0.0
    %1138 = vmatpush1.msra.mxu0 0.0
    %1139 = vmatprep.subr.mxu0 0.0
    %1140 = vmatpush1.msra.mxu0 0.0
    %1141 = vmatprep.subr.mxu0 0.0
    %1142 = vmatpush1.msra.mxu0 0.0
    %1143 = vmatprep.subr.mxu0 0.0
    %1144 = vmatpush1.msra.mxu0 0.0
    %1145 = vmatprep.subr.mxu0 0.0
    %1146 = vmatpush1.msra.mxu0 0.0
    %1147 = vmatprep.subr.mxu0 %v906
    %1148 = vmatpush1.msra.mxu0 %v905
    %1149 = vmatprep.subr.mxu0 %v898
    %1150 = vmatpush1.msra.mxu0 %v897
    %1151 = vmatprep.subr.mxu0 %v890
    %1152 = vmatpush1.msra.mxu0 %v889
    %1153 = vmatprep.subr.mxu0 %v882
    %1154 = vmatpush1.msra.mxu0 %v881
    %1155 = vmatprep.subr.mxu0 0.0
    %1156 = vmatpush2.msra.mxu0 0.0
    %1157 = vmatprep.subr.mxu0 0.0
    %1158 = vmatpush2.msra.mxu0 0.0
    %1159 = vmatprep.subr.mxu0 0.0
    %1160 = vmatpush2.msra.mxu0 0.0
    %1161 = vmatprep.subr.mxu0 0.0
    %1162 = vmatpush2.msra.mxu0 0.0
    %1163 = vmatprep.subr.mxu0 0.0
    %1164 = vmatpush2.msra.mxu0 0.0
    %1165 = vmatprep.subr.mxu0 0.0
    %1166 = vmatpush2.msra.mxu0 0.0
    %1167 = vmatprep.subr.mxu0 0.0
    %1168 = vmatpush2.msra.mxu0 0.0
    %1169 = vmatprep.subr.mxu0 0.0
    %1170 = vmatpush2.msra.mxu0 0.0
    %1171 = vmatprep.subr.mxu0 0.0
    %1172 = vmatpush2.msra.mxu0 0.0
    %1173 = vmatprep.subr.mxu0 0.0
    %1174 = vmatpush2.msra.mxu0 0.0
    %1175 = vmatprep.subr.mxu0 0.0
    %1176 = vmatpush2.msra.mxu0 0.0
    %1177 = vmatprep.subr.mxu0 0.0
    %1178 = vmatpush2.msra.mxu0 0.0
    %1179 = vmatprep.subr.mxu0 0.0
    %1180 = vmatpush2.msra.mxu0 0.0
    %1181 = vmatprep.subr.mxu0 0.0
    %1182 = vmatpush2.msra.mxu0 0.0
    %1183 = vmatprep.subr.mxu0 0.0
    %1184 = vmatpush2.msra.mxu0 0.0
    %1185 = vmatprep.subr.mxu0 0.0
    %1186 = vmatpush2.msra.mxu0 0.0
    %1187 = vmatprep.mubr.f32.mxu0 0.0
    %1188 = vmatmul.mubr.f32.gmra.mxu0 %v908
    %v1189 = vpop.f32.mrf.mxu0
    %v1190 = vadd.f32 0.0, %v1189
    %v1191 = vpop.f32.mrf.mxu0
    %v1192 = vadd.f32 0.0, %v1191
    %1193 = vdwg.mxu0
    %v1194 = vand.u32 2147483647, %v977
    %v1195 = vand.u32 2147483647, %v979
    %v1196 = vand.u32 2147483647, %v1048
    %v1197 = vand.u32 2147483647, %v1050
    %v1198 = vand.u32 2147483647, %v1119
    %v1199 = vand.u32 2147483647, %v1121
    %v1200 = vand.u32 2147483647, %v1190
    %v1201 = vand.u32 2147483647, %v1192
    %vm1202 = vcmask 1041408
    %v1203 = vsel %vm1202, %v1194, 0.0
    %v1204 = vrot.slane %v1203, 4
    %v1205 = vadd.f32 %v1203, %v1204
    %v1206 = vrot.slane %v1205, 2
    %v1207 = vadd.f32 %v1205, %v1206
    %v1208 = vrot.slane %v1207, 1
    %v1209 = vadd.f32 %v1207, %v1208
    %v1210 = vsel %vm1202, %v1195, 0.0
    %v1211 = vrot.slane %v1210, 4
    %v1212 = vadd.f32 %v1210, %v1211
    %v1213 = vrot.slane %v1212, 2
    %v1214 = vadd.f32 %v1212, %v1213
    %v1215 = vrot.slane %v1214, 1
    %v1216 = vadd.f32 %v1214, %v1215
    %v1217 = vsel %vm1202, %v1196, 0.0
    %v1218 = vrot.slane %v1217, 4
    %v1219 = vadd.f32 %v1217, %v1218
    %v1220 = vrot.slane %v1219, 2
    %v1221 = vadd.f32 %v1219, %v1220
    %v1222 = vrot.slane %v1221, 1
    %v1223 = vadd.f32 %v1221, %v1222
    %v1224 = vsel %vm1202, %v1197, 0.0
    %v1225 = vrot.slane %v1224, 4
    %v1226 = vadd.f32 %v1224, %v1225
    %v1227 = vrot.slane %v1226, 2
    %v1228 = vadd.f32 %v1226, %v1227
    %v1229 = vrot.slane %v1228, 1
    %v1230 = vadd.f32 %v1228, %v1229
    %v1231 = vsel %vm1202, %v1198, 0.0
    %v1232 = vrot.slane %v1231, 4
    %v1233 = vadd.f32 %v1231, %v1232
    %v1234 = vrot.slane %v1233, 2
    %v1235 = vadd.f32 %v1233, %v1234
    %v1236 = vrot.slane %v1235, 1
    %v1237 = vadd.f32 %v1235, %v1236
    %v1238 = vsel %vm1202, %v1199, 0.0
    %v1239 = vrot.slane %v1238, 4
    %v1240 = vadd.f32 %v1238, %v1239
    %v1241 = vrot.slane %v1240, 2
    %v1242 = vadd.f32 %v1240, %v1241
    %v1243 = vrot.slane %v1242, 1
    %v1244 = vadd.f32 %v1242, %v1243
    %v1245 = vsel %vm1202, %v1200, 0.0
    %v1246 = vrot.slane %v1245, 4
    %v1247 = vadd.f32 %v1245, %v1246
    %v1248 = vrot.slane %v1247, 2
    %v1249 = vadd.f32 %v1247, %v1248
    %v1250 = vrot.slane %v1249, 1
    %v1251 = vadd.f32 %v1249, %v1250
    %v1252 = vsel %vm1202, %v1201, 0.0
    %v1253 = vrot.slane %v1252, 4
    %v1254 = vadd.f32 %v1252, %v1253
    %v1255 = vrot.slane %v1254, 2
    %v1256 = vadd.f32 %v1254, %v1255
    %v1257 = vrot.slane %v1256, 1
    %v1258 = vadd.f32 %v1256, %v1257
    %v1259 = vrcp.pop 2.0
    %v1260 = vmul.f32 %v1209, %v1259
    %v1261 = vmul.f32 %v1216, %v1259
    %v1262 = vmul.f32 %v1223, %v1259
    %v1263 = vmul.f32 %v1230, %v1259
    %v1264 = vmul.f32 %v1237, %v1259
    %v1265 = vmul.f32 %v1244, %v1259
    %v1266 = vmul.f32 %v1251, %v1259
    %v1267 = vmul.f32 %v1258, %v1259
    %v1276 = vcombine.low %v1260, %v1261
    %v1277 = vcombine.low %v1262, %v1263
    %v1278 = vcombine.low %v1264, %v1265
    %v1279 = vcombine.low %v1266, %v1267
    %v1281 = vunpack.c.l.s4 1966171168
    %v1282 = vunpack.c.0.s8 %v1281
    %v1283 = vlaneseq
    %v1284 = vshrl.u32 %v1283, 7
    %v1285 = vsub.s32 %v1282, %v1284
    %v1286 = vrot.slane %v1276, %v1285
    %v1288 = vunpack.c.l.s4 1966171168
    %v1289 = vunpack.c.0.s8 %v1288
    %v1290 = vlaneseq
    %v1291 = vshrl.u32 %v1290, 7
    %v1292 = vsub.s32 %v1289, %v1291
    %v1293 = vrot.slane %v1277, %v1292
    %v1295 = vunpack.c.l.s4 1966171168
    %v1296 = vunpack.c.0.s8 %v1295
    %v1297 = vlaneseq
    %v1298 = vshrl.u32 %v1297, 7
    %v1299 = vsub.s32 %v1296, %v1298
    %v1300 = vrot.slane %v1278, %v1299
    %v1302 = vunpack.c.l.s4 1966171168
    %v1303 = vunpack.c.0.s8 %v1302
    %v1304 = vlaneseq
    %v1305 = vshrl.u32 %v1304, 7
    %v1306 = vsub.s32 %v1303, %v1305
    %v1307 = vrot.slane %v1279, %v1306
    %v1308 = vcombine.low %v1286, %v1293
    %v1309 = vcombine.low %v1300, %v1307
    %v1311 = vunpack.c.l.s4 1966171168
    %v1312 = vunpack.c.0.s8 %v1311
    %v1313 = vlaneseq
    %v1314 = vshrl.u32 %v1313, 7
    %v1315 = vsub.s32 %v1312, %v1314
    %v1316 = vrot.slane %v1308, %v1315
    %v1318 = vunpack.c.l.s4 1966171168
    %v1319 = vunpack.c.0.s8 %v1318
    %v1320 = vlaneseq
    %v1321 = vshrl.u32 %v1320, 7
    %v1322 = vsub.s32 %v1319, %v1321
    %v1323 = vrot.slane %v1309, %v1322
    %v1324 = vcombine.low %v1316, %v1323
    %1326 = vst [vmem:[#allocation4] sm:$0xff] %v1324
    // Predicated region
    $region26: #{tpu_custom_call.1} parent=1 // pred_check
      _
    $region27: #{tpu_custom_call.1} parent=1 // pred_check_branch
      %1328 = sbr.rel (0) target = $region29
    $region28: #{tpu_custom_call.1} parent=1 // pred_region
      %s1330 = ssub.s32 128, 128
      %1331 = vsyncadd [#allocation5], %s1330
      %s1333 = sshll.u32 [#allocation4], 4
      %s1334 = int_to_ptr.vmem [resolvable:$true] %s1333
      %1336 = dma.vmem_to_hbm [thread:$0]  %s1334, 128, %s7, [#allocation5]
    $region29: #{tpu_custom_call.1} parent=1 // pred_fallthru
      _
    // Predicated region
    $region30: #{tpu_custom_call.1} parent=1 // pred_check
      _
    $region31: #{tpu_custom_call.1} parent=1 // pred_check_branch
      %1338 = sbr.rel (0) target = $region33
    $region32: #{tpu_custom_call.1} parent=1 // pred_region
      %1339 = dma.done [#allocation5], 128
    $region33: #{tpu_custom_call.1} parent=1 // pred_fallthru
      _
    %1340 = vsyncpa [#allocation5], 1

</llo_original>
